<compile_context>
chip_gen: v7x
topology: tpu7x:2x2x1
jax: 0.10.0
libtpu: 0.0.40
codegen_flags: <defaults>
</compile_context>

<pallas_src>
import functools

import numpy as np
import jax
import jax.numpy as jnp
from jax import lax
from jax.experimental import pallas as pl
from jax.experimental.pallas import tpu as pltpu


def _capsule_kernel(x_ref, w_ref, expand_ref, reduce_ref, group_ref, out_ref,
                    *, num_capsule, dim_capsule, routings, mxu_dtype):
    # x_ref:      (bt, n_in, d_in)        batch slab
    # w_ref:      (d_in, nd_pad)          flat, lane-dense, zero-padded weights
    # expand_ref: (num, nd_pad)           broadcast c over dim within a capsule
    # reduce_ref: (nd_pad, num)           segmented sum over dim -> per-capsule
    # group_ref:  (nd_pad, nd_pad)        segmented sum over dim, broadcast back
    # out_ref:    (bt, nd_pad)            lane-dense output slab
    bt, n_in, d_in = x_ref.shape
    nd_pad = w_ref.shape[1]

    # ---- u_hat projection: one lane-dense MXU matmul (bf16 in, f32 acc) ----
    x2 = x_ref[...].reshape(bt * n_in, d_in).astype(mxu_dtype)
    u_flat = jnp.dot(x2, w_ref[...],
                     preferred_element_type=jnp.float32)   # (bt*n_in, nd_pad)
    u3 = u_flat.reshape(bt, n_in, nd_pad)                  # leading-dim split

    expand = expand_ref[...]
    reduce_mat = reduce_ref[...]
    group = group_ref[...]

    # ---- dynamic routing on lane-dense flat arrays --------------------------
    b_logits = jnp.zeros((bt * n_in, num_capsule), dtype=jnp.float32)
    out_flat = jnp.zeros((bt, nd_pad), dtype=jnp.float32)

    for it in range(routings):
        # softmax over the output-capsule axis (torch dim=1)
        bmax = jnp.max(b_logits, axis=-1, keepdims=True)
        eb = jnp.exp(b_logits - bmax)
        denom = jnp.sum(eb, axis=-1, keepdims=True)
        c = eb * pl.reciprocal(denom, approx=True)          # (bt*n_in, num)

        # broadcast c over dim within each capsule group -> (bt*n_in, nd_pad)
        c_rep = jnp.dot(c.astype(mxu_dtype), expand,
                        preferred_element_type=jnp.float32)

        # s[b, j, d] = sum_n c[b, n, j] * u_hat[b, n, j, d]  -> (bt, nd_pad)
        s = jnp.sum(c_rep.reshape(bt, n_in, nd_pad) * u3, axis=1)

        # squash variant used by the module: s / sqrt(||s||^2 + 1e-7)
        sq = jnp.dot((s * s).astype(mxu_dtype), group,
                     preferred_element_type=jnp.float32)
        out_flat = s * lax.rsqrt(sq + 1e-7)

        if it < routings - 1:
            # b[b, n, j] = sum_d outputs[b, j, d] * u_hat[b, n, j, d]
            prod = (u3 * out_flat[:, None, :]).reshape(bt * n_in, nd_pad)
            b_logits = jnp.dot(prod.astype(mxu_dtype), reduce_mat,
                               preferred_element_type=jnp.float32)

    out_ref[...] = out_flat.astype(out_ref.dtype)


def _footprint_bytes(bt, n_in, d_in, nd_pad):
    """Rough per-grid-step VMEM live-set estimate (with safety factor)."""
    f32, bf16 = 4, 2
    x_tile = 2 * bt * n_in * d_in * f32              # double-buffered x slab
    x_cast = bt * n_in * d_in * bf16                 # in-kernel bf16 copy of x
    w_res = 2 * d_in * nd_pad * bf16                 # resident weight slab
    consts = (nd_pad * nd_pad + 2 * 8 * nd_pad) * 2 * bf16   # routing matrices
    out_t = 2 * bt * nd_pad * f32                    # double-buffered output
    u3 = bt * n_in * nd_pad * f32                    # u_hat, live all routing
    tmps = 2 * bt * n_in * nd_pad * f32              # c_rep / prod temporaries
    return int(1.25 * (x_tile + x_cast + w_res + consts + out_t + u3 + tmps))


def _vmem_capacity_bytes():
    try:
        return int(pltpu.get_tpu_info().vmem_capacity_bytes)
    except Exception:
        return 64 << 20   # conservative fallback (v7x per-core VMEM)


def _pick_batch_block(B, n_in, d_in, nd_pad, budget, max_bt=1024):
    """Largest batch tile that divides B, keeps the output block legal
    (bt % 8 == 0 or bt == B) and fits the VMEM budget."""
    legal = [d for d in range(1, B + 1) if B % d == 0 and (d % 8 == 0 or d == B)]
    for cand in sorted(legal, reverse=True):
        if cand <= max_bt and _footprint_bytes(cand, n_in, d_in, nd_pad) <= budget:
            return cand
    return min(legal)


def capsule_forward(x, W, *, num_capsule, dim_capsule, routings,
                    mxu_dtype=jnp.bfloat16):
    """x: (B, n_in, d_in); W: (1, d_in, num*dim) (torch parameter layout)."""
    assert routings >= 1, "routings must be >= 1"
    B, n_in, d_in = x.shape
    nd = num_capsule * dim_capsule
    nd_pad = ((nd + 127) // 128) * 128          # lane-dense padded capsule axis

    # Flat, zero-padded weight slab (padded lanes stay exactly zero).
    w = jnp.pad(W.reshape(d_in, nd), ((0, 0), (0, nd_pad - nd))).astype(mxu_dtype)

    # Constant 0/1 routing matrices, built once on the host (exact in bf16).
    lane = np.arange(nd_pad)
    valid = lane < nd
    cap = np.where(valid, lane // dim_capsule, -1)
    expand_np = ((np.arange(num_capsule)[:, None] == cap[None, :])
                 & valid[None, :]).astype(np.float32)            # (num, nd_pad)
    reduce_np = expand_np.T                                      # (nd_pad, num)
    group_np = ((cap[:, None] == cap[None, :])
                & valid[:, None] & valid[None, :]).astype(np.float32)
    expand = jnp.asarray(expand_np, dtype=mxu_dtype)
    reduce_mat = jnp.asarray(reduce_np, dtype=mxu_dtype)
    group = jnp.asarray(group_np, dtype=mxu_dtype)

    # VMEM-budgeted batch tile and explicit scoped-VMEM limit.
    vmem_cap = _vmem_capacity_bytes()
    budget = int(vmem_cap * 0.75)
    bt = _pick_batch_block(B, n_in, d_in, nd_pad, budget)
    footprint = _footprint_bytes(bt, n_in, d_in, nd_pad)
    vmem_limit = int(min(max(footprint, 32 << 20), int(vmem_cap * 0.9)))

    kernel = functools.partial(
        _capsule_kernel,
        num_capsule=num_capsule, dim_capsule=dim_capsule,
        routings=routings, mxu_dtype=mxu_dtype)

    out_flat = pl.pallas_call(
        kernel,
        out_shape=jax.ShapeDtypeStruct((B, nd_pad), x.dtype),
        grid_spec=pltpu.PrefetchScalarGridSpec(
            num_scalar_prefetch=0,
            grid=(B // bt,),
            in_specs=[
                pl.BlockSpec((bt, n_in, d_in), lambda i: (i, 0, 0)),
                pl.BlockSpec((d_in, nd_pad), lambda i: (0, 0)),        # weights
                pl.BlockSpec((num_capsule, nd_pad), lambda i: (0, 0)),  # expand
                pl.BlockSpec((nd_pad, num_capsule), lambda i: (0, 0)),  # reduce
                pl.BlockSpec((nd_pad, nd_pad), lambda i: (0, 0)),       # group
            ],
            out_specs=pl.BlockSpec((bt, nd_pad), lambda i: (i, 0)),
        ),
        compiler_params=pltpu.CompilerParams(
            dimension_semantics=("parallel",),
            vmem_limit_bytes=vmem_limit),
    )(x, w, expand, reduce_mat, group)

    # Drop the zero padding and view as the module's (B, num, dim) output.
    return out_flat[:, :nd].reshape(B, num_capsule, dim_capsule)


def capsule_reference(x, W, *, num_capsule, dim_capsule, routings):
    """Pure-JAX f32 re-implementation of the PyTorch forward (verification)."""
    B, n_in, d_in = x.shape
    u = jnp.matmul(x, W)                                   # (B, N_in, num*dim)
    u = u.reshape(B, n_in, num_capsule, dim_capsule).transpose(0, 2, 1, 3)
    b = jnp.zeros(u.shape[:-1], jnp.float32)               # (B, num, N_in)
    outputs = None
    for i in range(routings):
        c = jax.nn.softmax(b, axis=1)
        s = jnp.sum(c[..., None] * u, axis=2)              # (B, num, dim)
        outputs = s / jnp.sqrt(jnp.sum(s * s, axis=-1, keepdims=True) + 1e-7)
        if i < routings - 1:
            b = jnp.sum(outputs[:, :, None, :] * u, axis=-1)
    return outputs


if __name__ == "__main__":
    # Small deterministic shapes consistent with the module's forward:
    # x is (batch, input_num_capsule, input_dim_capsule).
    B, n_in, d_in = 16, 8, 128
    num_capsule, dim_capsule, routings = 5, 5, 4

    key = jax.random.PRNGKey(0)
    kx, kw = jax.random.split(key)
    x = jax.random.normal(kx, (B, n_in, d_in), dtype=jnp.float32)

    # Deterministic xavier_normal_-style init for W (1, d_in, num*dim).
    fan_in = d_in * num_capsule * dim_capsule
    fan_out = 1 * num_capsule * dim_capsule
    std = (2.0 / (fan_in + fan_out)) ** 0.5
    W = std * jax.random.normal(
        kw, (1, d_in, num_capsule * dim_capsule), dtype=jnp.float32)

    out = jax.block_until_ready(
        capsule_forward(x, W, num_capsule=num_capsule, dim_capsule=dim_capsule,
                        routings=routings))
    ref = capsule_reference(x, W, num_capsule=num_capsule,
                            dim_capsule=dim_capsule, routings=routings)

    assert out.shape == (B, num_capsule, dim_capsule), out.shape
    max_err = float(jnp.max(jnp.abs(out - ref)))
    # bf16 MXU operands (f32 accumulation) vs. the pure-f32 reference:
    # use a correspondingly relaxed tolerance.
    assert jnp.allclose(out, ref, atol=3e-2, rtol=3e-2), max_err
    print("KERNEL_OK")
</pallas_src>

<mosaic_0001>
module attributes {stable_mosaic.version = 11 : i64} {
  func.func @_capsule_kernel(%arg0: i32, %arg1: memref<16x8x128xf32, #tpu.memory_space<vmem>>, %arg2: memref<128x128xbf16, #tpu.memory_space<vmem>>, %arg3: memref<5x128xbf16, #tpu.memory_space<vmem>>, %arg4: memref<128x5xbf16, #tpu.memory_space<vmem>>, %arg5: memref<128x128xbf16, #tpu.memory_space<vmem>>, %arg6: memref<16x128xf32, #tpu.memory_space<vmem>>) attributes {dimension_semantics = [#tpu.dimension_semantics<parallel>], iteration_bounds = array<i64: 1>, scalar_prefetch = 0 : i64, scratch_operands = 0 : i64, tpu.core_type = #tpu.core_type<tc>, window_params = [{transform_indices = @transform_0, window_bounds = array<i64: 16, 8, 128>}, {pipeline_mode = #tpu.pipeline_mode<synchronous>, transform_indices = @transform_1, window_bounds = array<i64: 128, 128>}, {pipeline_mode = #tpu.pipeline_mode<synchronous>, transform_indices = @transform_2, window_bounds = array<i64: 5, 128>}, {pipeline_mode = #tpu.pipeline_mode<synchronous>, transform_indices = @transform_3, window_bounds = array<i64: 128, 5>}, {pipeline_mode = #tpu.pipeline_mode<synchronous>, transform_indices = @transform_4, window_bounds = array<i64: 128, 128>}, {transform_indices = @transform_5, window_bounds = array<i64: 16, 128>}]} {
    %c0 = arith.constant 0 : index
    %c0_0 = arith.constant 0 : index
    %c0_1 = arith.constant 0 : index
    %0 = vector.load %arg1[%c0, %c0_0, %c0_1] : memref<16x8x128xf32, #tpu.memory_space<vmem>>, vector<16x8x128xf32>
    %1 = vector.shape_cast %0 : vector<16x8x128xf32> to vector<128x128xf32>
    %2 = arith.truncf %1 : vector<128x128xf32> to vector<128x128xbf16>
    %c0_2 = arith.constant 0 : index
    %c0_3 = arith.constant 0 : index
    %3 = vector.load %arg2[%c0_2, %c0_3] : memref<128x128xbf16, #tpu.memory_space<vmem>>, vector<128x128xbf16>
    %cst = arith.constant dense<0.000000e+00> : vector<128x128xf32>
    %4 = tpu.matmul %2, %3, %cst {dimension_numbers = #tpu.dot_dimension_numbers<[1], [0], [0], [1], [0, 0, 1, 1], [], []>} : vector<128x128xbf16>, vector<128x128xbf16>, vector<128x128xf32> -> vector<128x128xf32>
    %5 = vector.shape_cast %4 : vector<128x128xf32> to vector<16x8x128xf32>
    %c0_4 = arith.constant 0 : index
    %c0_5 = arith.constant 0 : index
    %6 = vector.load %arg3[%c0_4, %c0_5] : memref<5x128xbf16, #tpu.memory_space<vmem>>, vector<5x128xbf16>
    %c0_6 = arith.constant 0 : index
    %c0_7 = arith.constant 0 : index
    %7 = vector.load %arg4[%c0_6, %c0_7] : memref<128x5xbf16, #tpu.memory_space<vmem>>, vector<128x5xbf16>
    %c0_8 = arith.constant 0 : index
    %c0_9 = arith.constant 0 : index
    %8 = vector.load %arg5[%c0_8, %c0_9] : memref<128x128xbf16, #tpu.memory_space<vmem>>, vector<128x128xbf16>
    %cst_10 = arith.constant 0.000000e+00 : f32
    %9 = vector.broadcast %cst_10 : f32 to vector<128x5xf32>
    %cst_11 = arith.constant dense<0xFF800000> : vector<128xf32>
    %10 = vector.multi_reduction <maximumf>, %9, %cst_11 [1] : vector<128x5xf32> to vector<128xf32>
    %11 = vector.shape_cast %10 : vector<128xf32> to vector<128x1xf32>
    %12 = vector.broadcast %11 : vector<128x1xf32> to vector<128x5xf32>
    %13 = arith.subf %9, %12 : vector<128x5xf32>
    %14 = math.exp %13 : vector<128x5xf32>
    %cst_12 = arith.constant dense<0.000000e+00> : vector<128xf32>
    %15 = vector.multi_reduction <add>, %14, %cst_12 [1] : vector<128x5xf32> to vector<128xf32>
    %16 = vector.shape_cast %15 : vector<128xf32> to vector<128x1xf32>
    %17 = tpu.reciprocal %16 {approx = true} : vector<128x1xf32> -> vector<128x1xf32>
    %18 = vector.broadcast %17 : vector<128x1xf32> to vector<128x5xf32>
    %19 = arith.mulf %14, %18 : vector<128x5xf32>
    %20 = arith.truncf %19 : vector<128x5xf32> to vector<128x5xbf16>
    %cst_13 = arith.constant dense<0.000000e+00> : vector<128x128xf32>
    %21 = tpu.matmul %20, %6, %cst_13 {dimension_numbers = #tpu.dot_dimension_numbers<[1], [0], [0], [1], [0, 0, 1, 1], [], []>} : vector<128x5xbf16>, vector<5x128xbf16>, vector<128x128xf32> -> vector<128x128xf32>
    %22 = vector.shape_cast %21 : vector<128x128xf32> to vector<16x8x128xf32>
    %23 = arith.mulf %22, %5 : vector<16x8x128xf32>
    %cst_14 = arith.constant dense<0.000000e+00> : vector<16x128xf32>
    %24 = vector.multi_reduction <add>, %23, %cst_14 [1] : vector<16x8x128xf32> to vector<16x128xf32>
    %25 = arith.mulf %24, %24 : vector<16x128xf32>
    %26 = arith.truncf %25 : vector<16x128xf32> to vector<16x128xbf16>
    %cst_15 = arith.constant dense<0.000000e+00> : vector<16x128xf32>
    %27 = tpu.matmul %26, %8, %cst_15 {dimension_numbers = #tpu.dot_dimension_numbers<[1], [0], [0], [1], [0, 0, 1, 1], [], []>} : vector<16x128xbf16>, vector<128x128xbf16>, vector<16x128xf32> -> vector<16x128xf32>
    %cst_16 = arith.constant 1.000000e-07 : f32
    %28 = vector.broadcast %cst_16 : f32 to vector<16x128xf32>
    %29 = arith.addf %27, %28 : vector<16x128xf32>
    %30 = math.rsqrt %29 : vector<16x128xf32>
    %31 = arith.mulf %24, %30 : vector<16x128xf32>
    %32 = vector.shape_cast %31 : vector<16x128xf32> to vector<16x1x128xf32>
    %33 = vector.broadcast %32 : vector<16x1x128xf32> to vector<16x8x128xf32>
    %34 = arith.mulf %5, %33 : vector<16x8x128xf32>
    %35 = vector.shape_cast %34 : vector<16x8x128xf32> to vector<128x128xf32>
    %36 = arith.truncf %35 : vector<128x128xf32> to vector<128x128xbf16>
    %cst_17 = arith.constant dense<0.000000e+00> : vector<128x5xf32>
    %37 = tpu.matmul %36, %7, %cst_17 {dimension_numbers = #tpu.dot_dimension_numbers<[1], [0], [0], [1], [0, 0, 1, 1], [], []>} : vector<128x128xbf16>, vector<128x5xbf16>, vector<128x5xf32> -> vector<128x5xf32>
    %cst_18 = arith.constant dense<0xFF800000> : vector<128xf32>
    %38 = vector.multi_reduction <maximumf>, %37, %cst_18 [1] : vector<128x5xf32> to vector<128xf32>
    %39 = vector.shape_cast %38 : vector<128xf32> to vector<128x1xf32>
    %40 = vector.broadcast %39 : vector<128x1xf32> to vector<128x5xf32>
    %41 = arith.subf %37, %40 : vector<128x5xf32>
    %42 = math.exp %41 : vector<128x5xf32>
    %cst_19 = arith.constant dense<0.000000e+00> : vector<128xf32>
    %43 = vector.multi_reduction <add>, %42, %cst_19 [1] : vector<128x5xf32> to vector<128xf32>
    %44 = vector.shape_cast %43 : vector<128xf32> to vector<128x1xf32>
    %45 = tpu.reciprocal %44 {approx = true} : vector<128x1xf32> -> vector<128x1xf32>
    %46 = vector.broadcast %45 : vector<128x1xf32> to vector<128x5xf32>
    %47 = arith.mulf %42, %46 : vector<128x5xf32>
    %48 = arith.truncf %47 : vector<128x5xf32> to vector<128x5xbf16>
    %cst_20 = arith.constant dense<0.000000e+00> : vector<128x128xf32>
    %49 = tpu.matmul %48, %6, %cst_20 {dimension_numbers = #tpu.dot_dimension_numbers<[1], [0], [0], [1], [0, 0, 1, 1], [], []>} : vector<128x5xbf16>, vector<5x128xbf16>, vector<128x128xf32> -> vector<128x128xf32>
    %50 = vector.shape_cast %49 : vector<128x128xf32> to vector<16x8x128xf32>
    %51 = arith.mulf %50, %5 : vector<16x8x128xf32>
    %cst_21 = arith.constant dense<0.000000e+00> : vector<16x128xf32>
    %52 = vector.multi_reduction <add>, %51, %cst_21 [1] : vector<16x8x128xf32> to vector<16x128xf32>
    %53 = arith.mulf %52, %52 : vector<16x128xf32>
    %54 = arith.truncf %53 : vector<16x128xf32> to vector<16x128xbf16>
    %cst_22 = arith.constant dense<0.000000e+00> : vector<16x128xf32>
    %55 = tpu.matmul %54, %8, %cst_22 {dimension_numbers = #tpu.dot_dimension_numbers<[1], [0], [0], [1], [0, 0, 1, 1], [], []>} : vector<16x128xbf16>, vector<128x128xbf16>, vector<16x128xf32> -> vector<16x128xf32>
    %cst_23 = arith.constant 1.000000e-07 : f32
    %56 = vector.broadcast %cst_23 : f32 to vector<16x128xf32>
    %57 = arith.addf %55, %56 : vector<16x128xf32>
    %58 = math.rsqrt %57 : vector<16x128xf32>
    %59 = arith.mulf %52, %58 : vector<16x128xf32>
    %60 = vector.shape_cast %59 : vector<16x128xf32> to vector<16x1x128xf32>
    %61 = vector.broadcast %60 : vector<16x1x128xf32> to vector<16x8x128xf32>
    %62 = arith.mulf %5, %61 : vector<16x8x128xf32>
    %63 = vector.shape_cast %62 : vector<16x8x128xf32> to vector<128x128xf32>
    %64 = arith.truncf %63 : vector<128x128xf32> to vector<128x128xbf16>
    %cst_24 = arith.constant dense<0.000000e+00> : vector<128x5xf32>
    %65 = tpu.matmul %64, %7, %cst_24 {dimension_numbers = #tpu.dot_dimension_numbers<[1], [0], [0], [1], [0, 0, 1, 1], [], []>} : vector<128x128xbf16>, vector<128x5xbf16>, vector<128x5xf32> -> vector<128x5xf32>
    %cst_25 = arith.constant dense<0xFF800000> : vector<128xf32>
    %66 = vector.multi_reduction <maximumf>, %65, %cst_25 [1] : vector<128x5xf32> to vector<128xf32>
    %67 = vector.shape_cast %66 : vector<128xf32> to vector<128x1xf32>
    %68 = vector.broadcast %67 : vector<128x1xf32> to vector<128x5xf32>
    %69 = arith.subf %65, %68 : vector<128x5xf32>
    %70 = math.exp %69 : vector<128x5xf32>
    %cst_26 = arith.constant dense<0.000000e+00> : vector<128xf32>
    %71 = vector.multi_reduction <add>, %70, %cst_26 [1] : vector<128x5xf32> to vector<128xf32>
    %72 = vector.shape_cast %71 : vector<128xf32> to vector<128x1xf32>
    %73 = tpu.reciprocal %72 {approx = true} : vector<128x1xf32> -> vector<128x1xf32>
    %74 = vector.broadcast %73 : vector<128x1xf32> to vector<128x5xf32>
    %75 = arith.mulf %70, %74 : vector<128x5xf32>
    %76 = arith.truncf %75 : vector<128x5xf32> to vector<128x5xbf16>
    %cst_27 = arith.constant dense<0.000000e+00> : vector<128x128xf32>
    %77 = tpu.matmul %76, %6, %cst_27 {dimension_numbers = #tpu.dot_dimension_numbers<[1], [0], [0], [1], [0, 0, 1, 1], [], []>} : vector<128x5xbf16>, vector<5x128xbf16>, vector<128x128xf32> -> vector<128x128xf32>
    %78 = vector.shape_cast %77 : vector<128x128xf32> to vector<16x8x128xf32>
    %79 = arith.mulf %78, %5 : vector<16x8x128xf32>
    %cst_28 = arith.constant dense<0.000000e+00> : vector<16x128xf32>
    %80 = vector.multi_reduction <add>, %79, %cst_28 [1] : vector<16x8x128xf32> to vector<16x128xf32>
    %81 = arith.mulf %80, %80 : vector<16x128xf32>
    %82 = arith.truncf %81 : vector<16x128xf32> to vector<16x128xbf16>
    %cst_29 = arith.constant dense<0.000000e+00> : vector<16x128xf32>
    %83 = tpu.matmul %82, %8, %cst_29 {dimension_numbers = #tpu.dot_dimension_numbers<[1], [0], [0], [1], [0, 0, 1, 1], [], []>} : vector<16x128xbf16>, vector<128x128xbf16>, vector<16x128xf32> -> vector<16x128xf32>
    %cst_30 = arith.constant 1.000000e-07 : f32
    %84 = vector.broadcast %cst_30 : f32 to vector<16x128xf32>
    %85 = arith.addf %83, %84 : vector<16x128xf32>
    %86 = math.rsqrt %85 : vector<16x128xf32>
    %87 = arith.mulf %80, %86 : vector<16x128xf32>
    %88 = vector.shape_cast %87 : vector<16x128xf32> to vector<16x1x128xf32>
    %89 = vector.broadcast %88 : vector<16x1x128xf32> to vector<16x8x128xf32>
    %90 = arith.mulf %5, %89 : vector<16x8x128xf32>
    %91 = vector.shape_cast %90 : vector<16x8x128xf32> to vector<128x128xf32>
    %92 = arith.truncf %91 : vector<128x128xf32> to vector<128x128xbf16>
    %cst_31 = arith.constant dense<0.000000e+00> : vector<128x5xf32>
    %93 = tpu.matmul %92, %7, %cst_31 {dimension_numbers = #tpu.dot_dimension_numbers<[1], [0], [0], [1], [0, 0, 1, 1], [], []>} : vector<128x128xbf16>, vector<128x5xbf16>, vector<128x5xf32> -> vector<128x5xf32>
    %cst_32 = arith.constant dense<0xFF800000> : vector<128xf32>
    %94 = vector.multi_reduction <maximumf>, %93, %cst_32 [1] : vector<128x5xf32> to vector<128xf32>
    %95 = vector.shape_cast %94 : vector<128xf32> to vector<128x1xf32>
    %96 = vector.broadcast %95 : vector<128x1xf32> to vector<128x5xf32>
    %97 = arith.subf %93, %96 : vector<128x5xf32>
    %98 = math.exp %97 : vector<128x5xf32>
    %cst_33 = arith.constant dense<0.000000e+00> : vector<128xf32>
    %99 = vector.multi_reduction <add>, %98, %cst_33 [1] : vector<128x5xf32> to vector<128xf32>
    %100 = vector.shape_cast %99 : vector<128xf32> to vector<128x1xf32>
    %101 = tpu.reciprocal %100 {approx = true} : vector<128x1xf32> -> vector<128x1xf32>
    %102 = vector.broadcast %101 : vector<128x1xf32> to vector<128x5xf32>
    %103 = arith.mulf %98, %102 : vector<128x5xf32>
    %104 = arith.truncf %103 : vector<128x5xf32> to vector<128x5xbf16>
    %cst_34 = arith.constant dense<0.000000e+00> : vector<128x128xf32>
    %105 = tpu.matmul %104, %6, %cst_34 {dimension_numbers = #tpu.dot_dimension_numbers<[1], [0], [0], [1], [0, 0, 1, 1], [], []>} : vector<128x5xbf16>, vector<5x128xbf16>, vector<128x128xf32> -> vector<128x128xf32>
    %106 = vector.shape_cast %105 : vector<128x128xf32> to vector<16x8x128xf32>
    %107 = arith.mulf %106, %5 : vector<16x8x128xf32>
    %cst_35 = arith.constant dense<0.000000e+00> : vector<16x128xf32>
    %108 = vector.multi_reduction <add>, %107, %cst_35 [1] : vector<16x8x128xf32> to vector<16x128xf32>
    %109 = arith.mulf %108, %108 : vector<16x128xf32>
    %110 = arith.truncf %109 : vector<16x128xf32> to vector<16x128xbf16>
    %cst_36 = arith.constant dense<0.000000e+00> : vector<16x128xf32>
    %111 = tpu.matmul %110, %8, %cst_36 {dimension_numbers = #tpu.dot_dimension_numbers<[1], [0], [0], [1], [0, 0, 1, 1], [], []>} : vector<16x128xbf16>, vector<128x128xbf16>, vector<16x128xf32> -> vector<16x128xf32>
    %cst_37 = arith.constant 1.000000e-07 : f32
    %112 = vector.broadcast %cst_37 : f32 to vector<16x128xf32>
    %113 = arith.addf %111, %112 : vector<16x128xf32>
    %114 = math.rsqrt %113 : vector<16x128xf32>
    %115 = arith.mulf %108, %114 : vector<16x128xf32>
    %c0_38 = arith.constant 0 : index
    %c0_39 = arith.constant 0 : index
    %116 = vector.load %arg6[%c0_38, %c0_39] : memref<16x128xf32, #tpu.memory_space<vmem>>, vector<16x128xf32>
    tpu.vector_store %arg6[%c0_38, %c0_39], %115 {strides = array<i32>} : memref<16x128xf32, #tpu.memory_space<vmem>>, vector<16x128xf32>,
    return
  }
  func.func @transform_0(%arg0: i32) -> (i32, i32, i32) {
    %c0_i32 = arith.constant 0 : i32
    %c0_i32_0 = arith.constant 0 : i32
    %c0_i32_1 = arith.constant 0 : i32
    return %arg0, %c0_i32, %c0_i32_0 : i32, i32, i32
  }
  func.func @transform_1(%arg0: i32) -> (i32, i32) {
    %c0_i32 = arith.constant 0 : i32
    %c0_i32_0 = arith.constant 0 : i32
    %c0_i32_1 = arith.constant 0 : i32
    return %c0_i32, %c0_i32_0 : i32, i32
  }
  func.func @transform_2(%arg0: i32) -> (i32, i32) {
    %c0_i32 = arith.constant 0 : i32
    %c0_i32_0 = arith.constant 0 : i32
    %c0_i32_1 = arith.constant 0 : i32
    return %c0_i32, %c0_i32_0 : i32, i32
  }
  func.func @transform_3(%arg0: i32) -> (i32, i32) {
    %c0_i32 = arith.constant 0 : i32
    %c0_i32_0 = arith.constant 0 : i32
    %c0_i32_1 = arith.constant 0 : i32
    return %c0_i32, %c0_i32_0 : i32, i32
  }
  func.func @transform_4(%arg0: i32) -> (i32, i32) {
    %c0_i32 = arith.constant 0 : i32
    %c0_i32_0 = arith.constant 0 : i32
    %c0_i32_1 = arith.constant 0 : i32
    return %c0_i32, %c0_i32_0 : i32, i32
  }
  func.func @transform_5(%arg0: i32) -> (i32, i32) {
    %c0_i32 = arith.constant 0 : i32
    %c0_i32_0 = arith.constant 0 : i32
    return %arg0, %c0_i32 : i32, i32
  }
}

</mosaic_0001>

<llo_original>
// kernel: tpu_custom_call.1
$region0: #{tpu_custom_call.1}
  #allocation0 [shape = 'u32[]', space=smem, size = 0x4, offset = 0x4, fixed_abs, tag = 'smem constant byte address 0x4 - core index']
  #allocation1 [shape = 'u32[144,128]{1,0:T(1,128)}', space=vmem, size = 0x12000, scoped, tag = 'internal scratch']
  %s0 = inlined_call_operand.hbm [shape: f32[16,8,128], index: 0, kind: input, shape index: {}]
  %s1 = inlined_call_operand.vmem [shape: bf16[128,128], index: 1, kind: input, shape index: {}]
  %s2 = inlined_call_operand.vmem [shape: bf16[5,128], index: 2, kind: input, shape index: {}]
  %s3 = inlined_call_operand.vmem [shape: bf16[128,5], index: 3, kind: input, shape index: {}]
  %s4 = inlined_call_operand.hbm [shape: bf16[128,128], index: 4, kind: input, shape index: {}]
  %s5 = inlined_call_operand.hbm [shape: f32[16,128], index: 5, kind: output, shape index: {}]
  %s6 = sld [smem:[#allocation0]]
  $region38: #{tpu_custom_call.1} parent=0
    _
  %s8 = ssub.s32 1, %s6
  %s9 = scalar_select 0, %s8, %s6
  $region1: #{tpu_custom_call.1} parent=0
    #allocation2 [shape = 'u8[65536]{0}', space=vmem, size = 0x10000, scoped, tag = 'input window, operand 0, single buffered']
    #allocation3 [shape = 's32[1]{0}', space=sflag, size = 0x4, scoped, tag = 'scoped memory for tpu_custom_call.1']
    #allocation4 [shape = 's32[1]{0}', space=sflag, size = 0x4, scoped, tag = 'scoped memory for tpu_custom_call.1']
    #allocation5 [shape = 'u8[32768]{0}', space=vmem, size = 0x8000, scoped, tag = 'input window, operand 4, single buffered']
    #allocation6 [shape = 's32[1]{0}', space=sflag, size = 0x4, scoped, tag = 'scoped memory for tpu_custom_call.1']
    #allocation7 [shape = 'u8[8192]{0}', space=vmem, size = 0x2000, scoped, tag = 'output window, operand 0, single buffered']
    %10 = vsyncpa [#allocation3], 0
    %11 = vsyncpa [#allocation6], 0
    %12 = vsyncpa [#allocation4], 0
    // Predicated region
    $region2: #{tpu_custom_call.1} parent=1 // pred_check
      _
    $region3: #{tpu_custom_call.1} parent=1 // pred_check_branch
      %14 = sbr.rel (0) target = $region5
    $region4: #{tpu_custom_call.1} parent=1 // pred_region
      %s16 = ssub.s32 2048, 2048
      %17 = vsyncadd [#allocation3], %s16
      %s18 = sshll.u32 [#allocation2], 4
      %s19 = int_to_ptr.vmem [resolvable:$true] %s18
      %24 = dma.hbm_to_vmem [thread:$0]  %s0, 2048, %s19, [#allocation3], 128, 128, 8
    $region5: #{tpu_custom_call.1} parent=1 // pred_fallthru
      _
    // Predicated region
    $region6: #{tpu_custom_call.1} parent=1 // pred_check
      _
    $region7: #{tpu_custom_call.1} parent=1 // pred_check_branch
      %26 = sbr.rel (0) target = $region9
    $region8: #{tpu_custom_call.1} parent=1 // pred_region
      _
    $region9: #{tpu_custom_call.1} parent=1 // pred_fallthru
      _
    // Predicated region
    $region10: #{tpu_custom_call.1} parent=1 // pred_check
      _
    $region11: #{tpu_custom_call.1} parent=1 // pred_check_branch
      %28 = sbr.rel (0) target = $region13
    $region12: #{tpu_custom_call.1} parent=1 // pred_region
      _
    $region13: #{tpu_custom_call.1} parent=1 // pred_fallthru
      _
    // Predicated region
    $region14: #{tpu_custom_call.1} parent=1 // pred_check
      _
    $region15: #{tpu_custom_call.1} parent=1 // pred_check_branch
      %30 = sbr.rel (0) target = $region17
    $region16: #{tpu_custom_call.1} parent=1 // pred_region
      _
    $region17: #{tpu_custom_call.1} parent=1 // pred_fallthru
      _
    // Predicated region
    $region18: #{tpu_custom_call.1} parent=1 // pred_check
      _
    $region19: #{tpu_custom_call.1} parent=1 // pred_check_branch
      %32 = sbr.rel (0) target = $region21
    $region20: #{tpu_custom_call.1} parent=1 // pred_region
      %s34 = ssub.s32 1024, 1024
      %35 = vsyncadd [#allocation6], %s34
      %s36 = sshll.u32 [#allocation5], 4
      %s37 = int_to_ptr.vmem [resolvable:$true] %s36
      %42 = dma.hbm_to_vmem [thread:$0]  %s4, 1024, %s37, [#allocation6], 64, 64, 4
    $region21: #{tpu_custom_call.1} parent=1 // pred_fallthru
      _
    // Predicated region
    $region22: #{tpu_custom_call.1} parent=1 // pred_check
      _
    $region23: #{tpu_custom_call.1} parent=1 // pred_check_branch
      %44 = sbr.rel (0) target = $region25
    $region24: #{tpu_custom_call.1} parent=1 // pred_region
      %45 = dma.done [#allocation3], 2048
    $region25: #{tpu_custom_call.1} parent=1 // pred_fallthru
      _
    // Predicated region
    $region26: #{tpu_custom_call.1} parent=1 // pred_check
      _
    $region27: #{tpu_custom_call.1} parent=1 // pred_check_branch
      %47 = sbr.rel (0) target = $region29
    $region28: #{tpu_custom_call.1} parent=1 // pred_region
      %48 = dma.done [#allocation6], 1024
    $region29: #{tpu_custom_call.1} parent=1 // pred_fallthru
      _
    %v50 = vld [vmem:[#allocation2] sm:$0xff]
    %v51 = vld [vmem:[#allocation2 + $0x8] sm:$0xff]
    %v52 = vld [vmem:[#allocation2 + $0x10] sm:$0xff]
    %v53 = vld [vmem:[#allocation2 + $0x18] sm:$0xff]
    %v54 = vld [vmem:[#allocation2 + $0x20] sm:$0xff]
    %v55 = vld [vmem:[#allocation2 + $0x28] sm:$0xff]
    %v56 = vld [vmem:[#allocation2 + $0x30] sm:$0xff]
    %v57 = vld [vmem:[#allocation2 + $0x38] sm:$0xff]
    %v58 = vld [vmem:[#allocation2 + $0x40] sm:$0xff]
    %v59 = vld [vmem:[#allocation2 + $0x48] sm:$0xff]
    %v60 = vld [vmem:[#allocation2 + $0x50] sm:$0xff]
    %v61 = vld [vmem:[#allocation2 + $0x58] sm:$0xff]
    %v62 = vld [vmem:[#allocation2 + $0x60] sm:$0xff]
    %v63 = vld [vmem:[#allocation2 + $0x68] sm:$0xff]
    %v64 = vld [vmem:[#allocation2 + $0x70] sm:$0xff]
    %v65 = vld [vmem:[#allocation2 + $0x78] sm:$0xff]
    %v66 = vpack.c.bf16 %v51, %v50
    %v67 = vpack.c.bf16 %v53, %v52
    %v68 = vpack.c.bf16 %v55, %v54
    %v69 = vpack.c.bf16 %v57, %v56
    %v70 = vpack.c.bf16 %v59, %v58
    %v71 = vpack.c.bf16 %v61, %v60
    %v72 = vpack.c.bf16 %v63, %v62
    %v73 = vpack.c.bf16 %v65, %v64
    %v74 = vld [vmem:[%s1] sm:$0xf]
    %v75 = vld [vmem:[%s1 + $0x4] sm:$0xf]
    %v76 = vld [vmem:[%s1 + $0x8] sm:$0xf]
    %v77 = vld [vmem:[%s1 + $0xc] sm:$0xf]
    %v78 = vld [vmem:[%s1 + $0x10] sm:$0xf]
    %v79 = vld [vmem:[%s1 + $0x14] sm:$0xf]
    %v80 = vld [vmem:[%s1 + $0x18] sm:$0xf]
    %v81 = vld [vmem:[%s1 + $0x1c] sm:$0xf]
    %v82 = vld [vmem:[%s1 + $0x20] sm:$0xf]
    %v83 = vld [vmem:[%s1 + $0x24] sm:$0xf]
    %v84 = vld [vmem:[%s1 + $0x28] sm:$0xf]
    %v85 = vld [vmem:[%s1 + $0x2c] sm:$0xf]
    %v86 = vld [vmem:[%s1 + $0x30] sm:$0xf]
    %v87 = vld [vmem:[%s1 + $0x34] sm:$0xf]
    %v88 = vld [vmem:[%s1 + $0x38] sm:$0xf]
    %v89 = vld [vmem:[%s1 + $0x3c] sm:$0xf]
    %v106 = vunpack.c.l.b16 %v74
    %v107 = vunpack.c.l.b16 %v75
    %v108 = vunpack.c.l.b16 %v76
    %v109 = vunpack.c.l.b16 %v77
    %v110 = vunpack.c.l.b16 %v78
    %v111 = vunpack.c.l.b16 %v79
    %v112 = vunpack.c.l.b16 %v80
    %v113 = vunpack.c.l.b16 %v81
    %v114 = vunpack.c.l.b16 %v82
    %v115 = vunpack.c.l.b16 %v83
    %v116 = vunpack.c.l.b16 %v84
    %v117 = vunpack.c.l.b16 %v85
    %v118 = vunpack.c.l.b16 %v86
    %v119 = vunpack.c.l.b16 %v87
    %v120 = vunpack.c.l.b16 %v88
    %v121 = vunpack.c.l.b16 %v89
    %v122 = vpack.c.b16 %v107, %v106
    %v123 = vpack.c.b16 %v109, %v108
    %v124 = vpack.c.b16 %v111, %v110
    %v125 = vpack.c.b16 %v113, %v112
    %v126 = vpack.c.b16 %v115, %v114
    %v127 = vpack.c.b16 %v117, %v116
    %v128 = vpack.c.b16 %v119, %v118
    %v129 = vpack.c.b16 %v121, %v120
    %138 = vmatprep.subr.bf16.mxu0 0
    %139 = vmatpush1.bf16.msra.mxu0 %v122
    %140 = vmatprep.subr.bf16.mxu0 0
    %141 = vmatpush1.bf16.msra.mxu0 %v123
    %142 = vmatprep.subr.bf16.mxu0 0
    %143 = vmatpush1.bf16.msra.mxu0 %v124
    %144 = vmatprep.subr.bf16.mxu0 0
    %145 = vmatpush1.bf16.msra.mxu0 %v125
    %146 = vmatprep.subr.bf16.mxu0 0
    %147 = vmatpush1.bf16.msra.mxu0 %v126
    %148 = vmatprep.subr.bf16.mxu0 0
    %149 = vmatpush1.bf16.msra.mxu0 %v127
    %150 = vmatprep.subr.bf16.mxu0 0
    %151 = vmatpush1.bf16.msra.mxu0 %v128
    %152 = vmatprep.subr.bf16.mxu0 0
    %153 = vmatpush1.bf16.msra.mxu0 %v129
    %154 = vmatprep.subr.bf16.mxu0 0
    %155 = vmatpush1.bf16.msra.mxu0 0
    %156 = vmatprep.subr.bf16.mxu0 0
    %157 = vmatpush1.bf16.msra.mxu0 0
    %158 = vmatprep.subr.bf16.mxu0 0
    %159 = vmatpush1.bf16.msra.mxu0 0
    %160 = vmatprep.subr.bf16.mxu0 0
    %161 = vmatpush1.bf16.msra.mxu0 0
    %162 = vmatprep.subr.bf16.mxu0 0
    %163 = vmatpush1.bf16.msra.mxu0 0
    %164 = vmatprep.subr.bf16.mxu0 0
    %165 = vmatpush1.bf16.msra.mxu0 0
    %166 = vmatprep.subr.bf16.mxu0 0
    %167 = vmatpush1.bf16.msra.mxu0 0
    %168 = vmatprep.subr.bf16.mxu0 0
    %169 = vmatpush1.bf16.msra.mxu0 0
    %170 = vmatprep.mubr.bf16.mxu0 0
    %171 = vmatmul.mubr.bf16.gmra.mrb[0].mxu0 %v66
    %v172 = vpop.f32.mrb[0].mxu0
    %v173 = vadd.f32 0.0, %v172
    %v174 = vpop.f32.mrb[0].mxu0
    %v175 = vpop.f32.mrb[0].mxu0
    %v176 = vadd.f32 0.0, %v175
    %v177 = vpop.f32.mrb[0].mxu0
    %178 = vmatprep.mubr.bf16.mxu0 0
    %179 = vmatmul.mubr.bf16.gmra.mrb[0].mxu0 %v67
    %v180 = vpop.f32.mrb[0].mxu0
    %v181 = vadd.f32 0.0, %v180
    %v182 = vpop.f32.mrb[0].mxu0
    %v183 = vpop.f32.mrb[0].mxu0
    %v184 = vadd.f32 0.0, %v183
    %v185 = vpop.f32.mrb[0].mxu0
    %186 = vmatprep.mubr.bf16.mxu0 0
    %187 = vmatmul.mubr.bf16.gmra.mrb[0].mxu0 %v68
    %v188 = vpop.f32.mrb[0].mxu0
    %v189 = vadd.f32 0.0, %v188
    %v190 = vpop.f32.mrb[0].mxu0
    %v191 = vpop.f32.mrb[0].mxu0
    %v192 = vadd.f32 0.0, %v191
    %v193 = vpop.f32.mrb[0].mxu0
    %194 = vmatprep.mubr.bf16.mxu0 0
    %195 = vmatmul.mubr.bf16.gmra.mrb[0].mxu0 %v69
    %v196 = vpop.f32.mrb[0].mxu0
    %v197 = vadd.f32 0.0, %v196
    %v198 = vpop.f32.mrb[0].mxu0
    %v199 = vpop.f32.mrb[0].mxu0
    %v200 = vadd.f32 0.0, %v199
    %v201 = vpop.f32.mrb[0].mxu0
    %202 = vmatprep.mubr.bf16.mxu0 0
    %203 = vmatmul.mubr.bf16.gmra.mrb[0].mxu0 %v70
    %v204 = vpop.f32.mrb[0].mxu0
    %v205 = vadd.f32 0.0, %v204
    %v206 = vpop.f32.mrb[0].mxu0
    %v207 = vpop.f32.mrb[0].mxu0
    %v208 = vadd.f32 0.0, %v207
    %v209 = vpop.f32.mrb[0].mxu0
    %210 = vmatprep.mubr.bf16.mxu0 0
    %211 = vmatmul.mubr.bf16.gmra.mrb[0].mxu0 %v71
    %v212 = vpop.f32.mrb[0].mxu0
    %v213 = vadd.f32 0.0, %v212
    %v214 = vpop.f32.mrb[0].mxu0
    %v215 = vpop.f32.mrb[0].mxu0
    %v216 = vadd.f32 0.0, %v215
    %v217 = vpop.f32.mrb[0].mxu0
    %218 = vmatprep.mubr.bf16.mxu0 0
    %219 = vmatmul.mubr.bf16.gmra.mrb[0].mxu0 %v72
    %v220 = vpop.f32.mrb[0].mxu0
    %v221 = vadd.f32 0.0, %v220
    %v222 = vpop.f32.mrb[0].mxu0
    %v223 = vpop.f32.mrb[0].mxu0
    %v224 = vadd.f32 0.0, %v223
    %v225 = vpop.f32.mrb[0].mxu0
    %226 = vmatprep.mubr.bf16.mxu0 0
    %227 = vmatmul.mubr.bf16.gmra.mrb[0].mxu0 %v73
    %v228 = vpop.f32.mrb[0].mxu0
    %v229 = vadd.f32 0.0, %v228
    %v230 = vpop.f32.mrb[0].mxu0
    %v231 = vpop.f32.mrb[0].mxu0
    %v232 = vadd.f32 0.0, %v231
    %v233 = vpop.f32.mrb[0].mxu0
    %234 = vdwg.mxu0
    %v235 = vld [vmem:[%s2] sm:$0x7]
    %v236 = vld [vmem:[%s3] sm:$0xf]
    %v237 = vld [vmem:[%s3 + $0x4] sm:$0xf]
    %v238 = vld [vmem:[%s3 + $0x8] sm:$0xf]
    %v239 = vld [vmem:[%s3 + $0xc] sm:$0xf]
    %v240 = vld [vmem:[%s3 + $0x10] sm:$0xf]
    %v241 = vld [vmem:[%s3 + $0x14] sm:$0xf]
    %v242 = vld [vmem:[%s3 + $0x18] sm:$0xf]
    %v243 = vld [vmem:[%s3 + $0x1c] sm:$0xf]
    %v244 = vld [vmem:[%s3 + $0x20] sm:$0xf]
    %v245 = vld [vmem:[%s3 + $0x24] sm:$0xf]
    %v246 = vld [vmem:[%s3 + $0x28] sm:$0xf]
    %v247 = vld [vmem:[%s3 + $0x2c] sm:$0xf]
    %v248 = vld [vmem:[%s3 + $0x30] sm:$0xf]
    %v249 = vld [vmem:[%s3 + $0x34] sm:$0xf]
    %v250 = vld [vmem:[%s3 + $0x38] sm:$0xf]
    %v251 = vld [vmem:[%s3 + $0x3c] sm:$0xf]
    %v252 = vld [vmem:[#allocation5] sm:$0xf]
    %v253 = vld [vmem:[#allocation5 + $0x4] sm:$0xf]
    %v254 = vld [vmem:[#allocation5 + $0x8] sm:$0xf]
    %v255 = vld [vmem:[#allocation5 + $0xc] sm:$0xf]
    %v256 = vld [vmem:[#allocation5 + $0x10] sm:$0xf]
    %v257 = vld [vmem:[#allocation5 + $0x14] sm:$0xf]
    %v258 = vld [vmem:[#allocation5 + $0x18] sm:$0xf]
    %v259 = vld [vmem:[#allocation5 + $0x1c] sm:$0xf]
    %v260 = vld [vmem:[#allocation5 + $0x20] sm:$0xf]
    %v261 = vld [vmem:[#allocation5 + $0x24] sm:$0xf]
    %v262 = vld [vmem:[#allocation5 + $0x28] sm:$0xf]
    %v263 = vld [vmem:[#allocation5 + $0x2c] sm:$0xf]
    %v264 = vld [vmem:[#allocation5 + $0x30] sm:$0xf]
    %v265 = vld [vmem:[#allocation5 + $0x34] sm:$0xf]
    %v266 = vld [vmem:[#allocation5 + $0x38] sm:$0xf]
    %v267 = vld [vmem:[#allocation5 + $0x3c] sm:$0xf]
    %vm268 = vcmask 39936
    %v269 = vsel %vm268, 1.0, 0.0
    %270 = vadd.xlane.f32.xlu0 %v269
    %v271 = vpop.xlane.xlu0 %270
    %v272 = vrcp.pop %v271
    %v273 = vpack.c.bf16 %v272, %v272
    %v275 = vsel %vm268, %v273, 0
    %vm277 = vcmask 1041408
    %vm278 = vcmask 1042432
    %v279 = vsel %vm277, 4294967295, 65535
    %v280 = vsel %vm278, %v279, 0
    %v282 = vand.u32 %v235, %v280
    %284 = vmatprep.subr.bf16.mxu0 0
    %285 = vmatpush1.bf16.msra.mxu0 %v282
    %286 = vmatprep.subr.bf16.mxu0 0
    %287 = vmatpush1.bf16.msra.mxu0 0
    %288 = vmatprep.subr.bf16.mxu0 0
    %289 = vmatpush1.bf16.msra.mxu0 0
    %290 = vmatprep.subr.bf16.mxu0 0
    %291 = vmatpush1.bf16.msra.mxu0 0
    %292 = vmatprep.subr.bf16.mxu0 0
    %293 = vmatpush1.bf16.msra.mxu0 0
    %294 = vmatprep.subr.bf16.mxu0 0
    %295 = vmatpush1.bf16.msra.mxu0 0
    %296 = vmatprep.subr.bf16.mxu0 0
    %297 = vmatpush1.bf16.msra.mxu0 0
    %298 = vmatprep.subr.bf16.mxu0 0
    %299 = vmatpush1.bf16.msra.mxu0 0
    %300 = vmatprep.subr.bf16.mxu0 0
    %301 = vmatpush1.bf16.msra.mxu0 0
    %302 = vmatprep.subr.bf16.mxu0 0
    %303 = vmatpush1.bf16.msra.mxu0 0
    %304 = vmatprep.subr.bf16.mxu0 0
    %305 = vmatpush1.bf16.msra.mxu0 0
    %306 = vmatprep.subr.bf16.mxu0 0
    %307 = vmatpush1.bf16.msra.mxu0 0
    %308 = vmatprep.subr.bf16.mxu0 0
    %309 = vmatpush1.bf16.msra.mxu0 0
    %310 = vmatprep.subr.bf16.mxu0 0
    %311 = vmatpush1.bf16.msra.mxu0 0
    %312 = vmatprep.subr.bf16.mxu0 0
    %313 = vmatpush1.bf16.msra.mxu0 0
    %314 = vmatprep.subr.bf16.mxu0 0
    %315 = vmatpush1.bf16.msra.mxu0 0
    %316 = vmatprep.mubr.bf16.mxu0 0
    %317 = vmatmul.mubr.bf16.gmra.mrb[0].mxu0 %v275
    %v318 = vpop.f32.mrb[0].mxu0
    %v319 = vadd.f32 0.0, %v318
    %v320 = vpop.f32.mrb[0].mxu0
    %v321 = vpop.f32.mrb[0].mxu0
    %v322 = vadd.f32 0.0, %v321
    %v323 = vpop.f32.mrb[0].mxu0
    %324 = vmatprep.mubr.bf16.mxu0 0
    %325 = vmatmul.mubr.bf16.gmra.mrb[0].mxu0 %v275
    %v326 = vpop.f32.mrb[0].mxu0
    %v327 = vadd.f32 0.0, %v326
    %v328 = vpop.f32.mrb[0].mxu0
    %v329 = vpop.f32.mrb[0].mxu0
    %v330 = vadd.f32 0.0, %v329
    %v331 = vpop.f32.mrb[0].mxu0
    %332 = vmatprep.mubr.bf16.mxu0 0
    %333 = vmatmul.mubr.bf16.gmra.mrb[0].mxu0 %v275
    %v334 = vpop.f32.mrb[0].mxu0
    %v335 = vadd.f32 0.0, %v334
    %v336 = vpop.f32.mrb[0].mxu0
    %v337 = vpop.f32.mrb[0].mxu0
    %v338 = vadd.f32 0.0, %v337
    %v339 = vpop.f32.mrb[0].mxu0
    %340 = vmatprep.mubr.bf16.mxu0 0
    %341 = vmatmul.mubr.bf16.gmra.mrb[0].mxu0 %v275
    %v342 = vpop.f32.mrb[0].mxu0
    %v343 = vadd.f32 0.0, %v342
    %v344 = vpop.f32.mrb[0].mxu0
    %v345 = vpop.f32.mrb[0].mxu0
    %v346 = vadd.f32 0.0, %v345
    %v347 = vpop.f32.mrb[0].mxu0
    %348 = vmatprep.mubr.bf16.mxu0 0
    %349 = vmatmul.mubr.bf16.gmra.mrb[0].mxu0 %v275
    %v350 = vpop.f32.mrb[0].mxu0
    %v351 = vadd.f32 0.0, %v350
    %v352 = vpop.f32.mrb[0].mxu0
    %v353 = vpop.f32.mrb[0].mxu0
    %v354 = vadd.f32 0.0, %v353
    %v355 = vpop.f32.mrb[0].mxu0
    %356 = vmatprep.mubr.bf16.mxu0 0
    %357 = vmatmul.mubr.bf16.gmra.mrb[0].mxu0 %v275
    %v358 = vpop.f32.mrb[0].mxu0
    %v359 = vadd.f32 0.0, %v358
    %v360 = vpop.f32.mrb[0].mxu0
    %v361 = vpop.f32.mrb[0].mxu0
    %v362 = vadd.f32 0.0, %v361
    %v363 = vpop.f32.mrb[0].mxu0
    %364 = vmatprep.mubr.bf16.mxu0 0
    %365 = vmatmul.mubr.bf16.gmra.mrb[0].mxu0 %v275
    %v366 = vpop.f32.mrb[0].mxu0
    %v367 = vadd.f32 0.0, %v366
    %v368 = vpop.f32.mrb[0].mxu0
    %v369 = vpop.f32.mrb[0].mxu0
    %v370 = vadd.f32 0.0, %v369
    %v371 = vpop.f32.mrb[0].mxu0
    %372 = vmatprep.mubr.bf16.mxu0 0
    %373 = vmatmul.mubr.bf16.gmra.mrb[0].mxu0 %v275
    %v374 = vpop.f32.mrb[0].mxu0
    %v375 = vadd.f32 0.0, %v374
    %v376 = vpop.f32.mrb[0].mxu0
    %v377 = vpop.f32.mrb[0].mxu0
    %v378 = vadd.f32 0.0, %v377
    %v379 = vpop.f32.mrb[0].mxu0
    %380 = vdwg.mxu0
    %v381 = vmul.f32 %v319, %v173
    %v382 = vmul.f32 %v322, %v176
    %v383 = vmul.f32 %v327, %v181
    %v384 = vmul.f32 %v330, %v184
    %v385 = vmul.f32 %v335, %v189
    %v386 = vmul.f32 %v338, %v192
    %v387 = vmul.f32 %v343, %v197
    %v388 = vmul.f32 %v346, %v200
    %v389 = vmul.f32 %v351, %v205
    %v390 = vmul.f32 %v354, %v208
    %v391 = vmul.f32 %v359, %v213
    %v392 = vmul.f32 %v362, %v216
    %v393 = vmul.f32 %v367, %v221
    %v394 = vmul.f32 %v370, %v224
    %v395 = vmul.f32 %v375, %v229
    %v396 = vmul.f32 %v378, %v232
    %v397 = vrot.slane %v381, 4
    %v398 = vadd.f32 %v381, %v397
    %v399 = vrot.slane %v398, 2
    %v400 = vadd.f32 %v398, %v399
    %v401 = vrot.slane %v400, 1
    %v402 = vadd.f32 %v400, %v401
    %v403 = vrot.slane %v382, 4
    %v404 = vadd.f32 %v382, %v403
    %v405 = vrot.slane %v404, 2
    %v406 = vadd.f32 %v404, %v405
    %v407 = vrot.slane %v406, 1
    %v408 = vadd.f32 %v406, %v407
    %v409 = vrot.slane %v383, 4
    %v410 = vadd.f32 %v383, %v409
    %v411 = vrot.slane %v410, 2
    %v412 = vadd.f32 %v410, %v411
    %v413 = vrot.slane %v412, 1
    %v414 = vadd.f32 %v412, %v413
    %v415 = vrot.slane %v384, 4
    %v416 = vadd.f32 %v384, %v415
    %v417 = vrot.slane %v416, 2
    %v418 = vadd.f32 %v416, %v417
    %v419 = vrot.slane %v418, 1
    %v420 = vadd.f32 %v418, %v419
    %v421 = vrot.slane %v385, 4
    %v422 = vadd.f32 %v385, %v421
    %v423 = vrot.slane %v422, 2
    %v424 = vadd.f32 %v422, %v423
    %v425 = vrot.slane %v424, 1
    %v426 = vadd.f32 %v424, %v425
    %v427 = vrot.slane %v386, 4
    %v428 = vadd.f32 %v386, %v427
    %v429 = vrot.slane %v428, 2
    %v430 = vadd.f32 %v428, %v429
    %v431 = vrot.slane %v430, 1
    %v432 = vadd.f32 %v430, %v431
    %v433 = vrot.slane %v387, 4
    %v434 = vadd.f32 %v387, %v433
    %v435 = vrot.slane %v434, 2
    %v436 = vadd.f32 %v434, %v435
    %v437 = vrot.slane %v436, 1
    %v438 = vadd.f32 %v436, %v437
    %v439 = vrot.slane %v388, 4
    %v440 = vadd.f32 %v388, %v439
    %v441 = vrot.slane %v440, 2
    %v442 = vadd.f32 %v440, %v441
    %v443 = vrot.slane %v442, 1
    %v444 = vadd.f32 %v442, %v443
    %v445 = vrot.slane %v389, 4
    %v446 = vadd.f32 %v389, %v445
    %v447 = vrot.slane %v446, 2
    %v448 = vadd.f32 %v446, %v447
    %v449 = vrot.slane %v448, 1
    %v450 = vadd.f32 %v448, %v449
    %v451 = vrot.slane %v390, 4
    %v452 = vadd.f32 %v390, %v451
    %v453 = vrot.slane %v452, 2
    %v454 = vadd.f32 %v452, %v453
    %v455 = vrot.slane %v454, 1
    %v456 = vadd.f32 %v454, %v455
    %v457 = vrot.slane %v391, 4
    %v458 = vadd.f32 %v391, %v457
    %v459 = vrot.slane %v458, 2
    %v460 = vadd.f32 %v458, %v459
    %v461 = vrot.slane %v460, 1
    %v462 = vadd.f32 %v460, %v461
    %v463 = vrot.slane %v392, 4
    %v464 = vadd.f32 %v392, %v463
    %v465 = vrot.slane %v464, 2
    %v466 = vadd.f32 %v464, %v465
    %v467 = vrot.slane %v466, 1
    %v468 = vadd.f32 %v466, %v467
    %v469 = vrot.slane %v393, 4
    %v470 = vadd.f32 %v393, %v469
    %v471 = vrot.slane %v470, 2
    %v472 = vadd.f32 %v470, %v471
    %v473 = vrot.slane %v472, 1
    %v474 = vadd.f32 %v472, %v473
    %v475 = vrot.slane %v394, 4
    %v476 = vadd.f32 %v394, %v475
    %v477 = vrot.slane %v476, 2
    %v478 = vadd.f32 %v476, %v477
    %v479 = vrot.slane %v478, 1
    %v480 = vadd.f32 %v478, %v479
    %v481 = vrot.slane %v395, 4
    %v482 = vadd.f32 %v395, %v481
    %v483 = vrot.slane %v482, 2
    %v484 = vadd.f32 %v482, %v483
    %v485 = vrot.slane %v484, 1
    %v486 = vadd.f32 %v484, %v485
    %v487 = vrot.slane %v396, 4
    %v488 = vadd.f32 %v396, %v487
    %v489 = vrot.slane %v488, 2
    %v490 = vadd.f32 %v488, %v489
    %v491 = vrot.slane %v490, 1
    %v492 = vadd.f32 %v490, %v491
    %v493 = vmul.f32 %v402, %v402
    %v494 = vmul.f32 %v408, %v408
    %v495 = vmul.f32 %v414, %v414
    %v496 = vmul.f32 %v420, %v420
    %v497 = vmul.f32 %v426, %v426
    %v498 = vmul.f32 %v432, %v432
    %v499 = vmul.f32 %v438, %v438
    %v500 = vmul.f32 %v444, %v444
    %v501 = vmul.f32 %v450, %v450
    %v502 = vmul.f32 %v456, %v456
    %v503 = vmul.f32 %v462, %v462
    %v504 = vmul.f32 %v468, %v468
    %v505 = vmul.f32 %v474, %v474
    %v506 = vmul.f32 %v480, %v480
    %v507 = vmul.f32 %v486, %v486
    %v508 = vmul.f32 %v492, %v492
    %v509 = vpack.c.bf16 %v493, %v493
    %v510 = vpack.c.bf16 %v494, %v494
    %v511 = vpack.c.bf16 %v495, %v495
    %v512 = vpack.c.bf16 %v496, %v496
    %v513 = vpack.c.bf16 %v497, %v497
    %v514 = vpack.c.bf16 %v498, %v498
    %v515 = vpack.c.bf16 %v499, %v499
    %v516 = vpack.c.bf16 %v500, %v500
    %v517 = vpack.c.bf16 %v501, %v501
    %v518 = vpack.c.bf16 %v502, %v502
    %v519 = vpack.c.bf16 %v503, %v503
    %v520 = vpack.c.bf16 %v504, %v504
    %v521 = vpack.c.bf16 %v505, %v505
    %v522 = vpack.c.bf16 %v506, %v506
    %v523 = vpack.c.bf16 %v507, %v507
    %v524 = vpack.c.bf16 %v508, %v508
    %v541 = vunpack.c.l.b16 %v509
    %v542 = vunpack.c.l.b16 %v510
    %v543 = vunpack.c.l.b16 %v511
    %v544 = vunpack.c.l.b16 %v512
    %v545 = vunpack.c.l.b16 %v513
    %v546 = vunpack.c.l.b16 %v514
    %v547 = vunpack.c.l.b16 %v515
    %v548 = vunpack.c.l.b16 %v516
    %v549 = vunpack.c.l.b16 %v517
    %v550 = vunpack.c.l.b16 %v518
    %v551 = vunpack.c.l.b16 %v519
    %v552 = vunpack.c.l.b16 %v520
    %v553 = vunpack.c.l.b16 %v521
    %v554 = vunpack.c.l.b16 %v522
    %v555 = vunpack.c.l.b16 %v523
    %v556 = vunpack.c.l.b16 %v524
    %vm557 = vcmask 1041409
    %v558 = vsel %vm557, %v542, %v541
    %vm559 = vcmask 1042434
    %v560 = vsel %vm559, %v543, %v558
    %vm561 = vcmask 1043459
    %v562 = vsel %vm561, %v544, %v560
    %vm563 = vcmask 1044484
    %v564 = vsel %vm563, %v545, %v562
    %vm565 = vcmask 1045509
    %v566 = vsel %vm565, %v546, %v564
    %vm567 = vcmask 1046534
    %v568 = vsel %vm567, %v547, %v566
    %vm569 = vcmask 1047559
    %v570 = vsel %vm569, %v548, %v568
    %v571 = vsel %vm557, %v550, %v549
    %v572 = vsel %vm559, %v551, %v571
    %v573 = vsel %vm561, %v552, %v572
    %v574 = vsel %vm563, %v553, %v573
    %v575 = vsel %vm565, %v554, %v574
    %v576 = vsel %vm567, %v555, %v575
    %v577 = vsel %vm569, %v556, %v576
    %v578 = vpack.c.b16 %v577, %v570
    %v596 = vunpack.c.l.b16 %v252
    %v597 = vunpack.c.l.b16 %v253
    %v598 = vunpack.c.l.b16 %v254
    %v599 = vunpack.c.l.b16 %v255
    %v600 = vunpack.c.l.b16 %v256
    %v601 = vunpack.c.l.b16 %v257
    %v602 = vunpack.c.l.b16 %v258
    %v603 = vunpack.c.l.b16 %v259
    %v604 = vunpack.c.l.b16 %v260
    %v605 = vunpack.c.l.b16 %v261
    %v606 = vunpack.c.l.b16 %v262
    %v607 = vunpack.c.l.b16 %v263
    %v608 = vunpack.c.l.b16 %v264
    %v609 = vunpack.c.l.b16 %v265
    %v610 = vunpack.c.l.b16 %v266
    %v611 = vunpack.c.l.b16 %v267
    %v612 = vpack.c.b16 %v597, %v596
    %v613 = vpack.c.b16 %v599, %v598
    %v614 = vpack.c.b16 %v601, %v600
    %v615 = vpack.c.b16 %v603, %v602
    %v616 = vpack.c.b16 %v605, %v604
    %v617 = vpack.c.b16 %v607, %v606
    %v618 = vpack.c.b16 %v609, %v608
    %v619 = vpack.c.b16 %v611, %v610
    %628 = vmatprep.subr.bf16.mxu0 0
    %629 = vmatpush1.bf16.msra.mxu0 %v612
    %630 = vmatprep.subr.bf16.mxu0 0
    %631 = vmatpush1.bf16.msra.mxu0 %v613
    %632 = vmatprep.subr.bf16.mxu0 0
    %633 = vmatpush1.bf16.msra.mxu0 %v614
    %634 = vmatprep.subr.bf16.mxu0 0
    %635 = vmatpush1.bf16.msra.mxu0 %v615
    %636 = vmatprep.subr.bf16.mxu0 0
    %637 = vmatpush1.bf16.msra.mxu0 %v616
    %638 = vmatprep.subr.bf16.mxu0 0
    %639 = vmatpush1.bf16.msra.mxu0 %v617
    %640 = vmatprep.subr.bf16.mxu0 0
    %641 = vmatpush1.bf16.msra.mxu0 %v618
    %642 = vmatprep.subr.bf16.mxu0 0
    %643 = vmatpush1.bf16.msra.mxu0 %v619
    %644 = vmatprep.subr.bf16.mxu0 0
    %645 = vmatpush1.bf16.msra.mxu0 0
    %646 = vmatprep.subr.bf16.mxu0 0
    %647 = vmatpush1.bf16.msra.mxu0 0
    %648 = vmatprep.subr.bf16.mxu0 0
    %649 = vmatpush1.bf16.msra.mxu0 0
    %650 = vmatprep.subr.bf16.mxu0 0
    %651 = vmatpush1.bf16.msra.mxu0 0
    %652 = vmatprep.subr.bf16.mxu0 0
    %653 = vmatpush1.bf16.msra.mxu0 0
    %654 = vmatprep.subr.bf16.mxu0 0
    %655 = vmatpush1.bf16.msra.mxu0 0
    %656 = vmatprep.subr.bf16.mxu0 0
    %657 = vmatpush1.bf16.msra.mxu0 0
    %658 = vmatprep.subr.bf16.mxu0 0
    %659 = vmatpush1.bf16.msra.mxu0 0
    %660 = vmatprep.mubr.bf16.mxu0 0
    %661 = vmatmul.mubr.bf16.gmra.mrb[0].mxu0 %v578
    %v662 = vpop.f32.mrb[0].mxu0
    %v663 = vadd.f32 1e-07, %v662
    %v664 = vpop.f32.mrb[0].mxu0
    %v665 = vpop.f32.mrb[0].mxu0
    %v666 = vadd.f32 1e-07, %v665
    %v667 = vpop.f32.mrb[0].mxu0
    %668 = vdwg.mxu0
    %v669 = vrsqrt.pop %v663
    %v670 = vrsqrt.pop %v666
    %v673 = vrot.slane %v669, 1
    %v674 = vrot.slane %v669, 2
    %v675 = vrot.slane %v669, 3
    %v676 = vrot.slane %v669, 4
    %v677 = vrot.slane %v669, 5
    %v678 = vrot.slane %v669, 6
    %v679 = vrot.slane %v669, 7
    %v680 = vrot.slane %v670, 1
    %v681 = vrot.slane %v670, 2
    %v682 = vrot.slane %v670, 3
    %v683 = vrot.slane %v670, 4
    %v684 = vrot.slane %v670, 5
    %v685 = vrot.slane %v670, 6
    %v686 = vrot.slane %v670, 7
    %v703 = vmul.f32 %v402, %v669
    %v704 = vmul.f32 %v408, %v673
    %v705 = vmul.f32 %v414, %v674
    %v706 = vmul.f32 %v420, %v675
    %v707 = vmul.f32 %v426, %v676
    %v708 = vmul.f32 %v432, %v677
    %v709 = vmul.f32 %v438, %v678
    %v710 = vmul.f32 %v444, %v679
    %v711 = vmul.f32 %v450, %v670
    %v712 = vmul.f32 %v456, %v680
    %v713 = vmul.f32 %v462, %v681
    %v714 = vmul.f32 %v468, %v682
    %v715 = vmul.f32 %v474, %v683
    %v716 = vmul.f32 %v480, %v684
    %v717 = vmul.f32 %v486, %v685
    %v718 = vmul.f32 %v492, %v686
    %v719 = vlaneseq
    %v720 = vshrl.u32 %v719, 7
    %v721 = vsub.s32 0, %v720
    %v722 = vrot.slane %v703, %v721
    %v723 = vlaneseq
    %v724 = vshrl.u32 %v723, 7
    %v725 = vsub.s32 0, %v724
    %v726 = vrot.slane %v704, %v725
    %v727 = vlaneseq
    %v728 = vshrl.u32 %v727, 7
    %v729 = vsub.s32 0, %v728
    %v730 = vrot.slane %v705, %v729
    %v731 = vlaneseq
    %v732 = vshrl.u32 %v731, 7
    %v733 = vsub.s32 0, %v732
    %v734 = vrot.slane %v706, %v733
    %v735 = vlaneseq
    %v736 = vshrl.u32 %v735, 7
    %v737 = vsub.s32 0, %v736
    %v738 = vrot.slane %v707, %v737
    %v739 = vlaneseq
    %v740 = vshrl.u32 %v739, 7
    %v741 = vsub.s32 0, %v740
    %v742 = vrot.slane %v708, %v741
    %v743 = vlaneseq
    %v744 = vshrl.u32 %v743, 7
    %v745 = vsub.s32 0, %v744
    %v746 = vrot.slane %v709, %v745
    %v747 = vlaneseq
    %v748 = vshrl.u32 %v747, 7
    %v749 = vsub.s32 0, %v748
    %v750 = vrot.slane %v710, %v749
    %v751 = vlaneseq
    %v752 = vshrl.u32 %v751, 7
    %v753 = vsub.s32 0, %v752
    %v754 = vrot.slane %v711, %v753
    %v755 = vlaneseq
    %v756 = vshrl.u32 %v755, 7
    %v757 = vsub.s32 0, %v756
    %v758 = vrot.slane %v712, %v757
    %v759 = vlaneseq
    %v760 = vshrl.u32 %v759, 7
    %v761 = vsub.s32 0, %v760
    %v762 = vrot.slane %v713, %v761
    %v763 = vlaneseq
    %v764 = vshrl.u32 %v763, 7
    %v765 = vsub.s32 0, %v764
    %v766 = vrot.slane %v714, %v765
    %v767 = vlaneseq
    %v768 = vshrl.u32 %v767, 7
    %v769 = vsub.s32 0, %v768
    %v770 = vrot.slane %v715, %v769
    %v771 = vlaneseq
    %v772 = vshrl.u32 %v771, 7
    %v773 = vsub.s32 0, %v772
    %v774 = vrot.slane %v716, %v773
    %v775 = vlaneseq
    %v776 = vshrl.u32 %v775, 7
    %v777 = vsub.s32 0, %v776
    %v778 = vrot.slane %v717, %v777
    %v779 = vlaneseq
    %v780 = vshrl.u32 %v779, 7
    %v781 = vsub.s32 0, %v780
    %v782 = vrot.slane %v718, %v781
    %v783 = vmul.f32 %v173, %v722
    %v784 = vmul.f32 %v176, %v726
    %v785 = vmul.f32 %v181, %v730
    %v786 = vmul.f32 %v184, %v734
    %v787 = vmul.f32 %v189, %v738
    %v788 = vmul.f32 %v192, %v742
    %v789 = vmul.f32 %v197, %v746
    %v790 = vmul.f32 %v200, %v750
    %v791 = vmul.f32 %v205, %v754
    %v792 = vmul.f32 %v208, %v758
    %v793 = vmul.f32 %v213, %v762
    %v794 = vmul.f32 %v216, %v766
    %v795 = vmul.f32 %v221, %v770
    %v796 = vmul.f32 %v224, %v774
    %v797 = vmul.f32 %v229, %v778
    %v798 = vmul.f32 %v232, %v782
    %v799 = vpack.c.bf16 %v784, %v783
    %v800 = vpack.c.bf16 %v786, %v785
    %v801 = vpack.c.bf16 %v788, %v787
    %v802 = vpack.c.bf16 %v790, %v789
    %v803 = vpack.c.bf16 %v792, %v791
    %v804 = vpack.c.bf16 %v794, %v793
    %v805 = vpack.c.bf16 %v796, %v795
    %v806 = vpack.c.bf16 %v798, %v797
    %v823 = vunpack.c.l.b16 %v236
    %v824 = vunpack.c.l.b16 %v237
    %v825 = vunpack.c.l.b16 %v238
    %v826 = vunpack.c.l.b16 %v239
    %v827 = vunpack.c.l.b16 %v240
    %v828 = vunpack.c.l.b16 %v241
    %v829 = vunpack.c.l.b16 %v242
    %v830 = vunpack.c.l.b16 %v243
    %v831 = vunpack.c.l.b16 %v244
    %v832 = vunpack.c.l.b16 %v245
    %v833 = vunpack.c.l.b16 %v246
    %v834 = vunpack.c.l.b16 %v247
    %v835 = vunpack.c.l.b16 %v248
    %v836 = vunpack.c.l.b16 %v249
    %v837 = vunpack.c.l.b16 %v250
    %v838 = vunpack.c.l.b16 %v251
    %v839 = vpack.c.b16 %v824, %v823
    %v840 = vpack.c.b16 %v826, %v825
    %v841 = vpack.c.b16 %v828, %v827
    %v842 = vpack.c.b16 %v830, %v829
    %v843 = vpack.c.b16 %v832, %v831
    %v844 = vpack.c.b16 %v834, %v833
    %v845 = vpack.c.b16 %v836, %v835
    %v846 = vpack.c.b16 %v838, %v837
    %855 = vmatprep.subr.bf16.mxu0 0
    %856 = vmatpush1.bf16.msra.mxu0 %v839
    %857 = vmatprep.subr.bf16.mxu0 0
    %858 = vmatpush1.bf16.msra.mxu0 %v840
    %859 = vmatprep.subr.bf16.mxu0 0
    %860 = vmatpush1.bf16.msra.mxu0 %v841
    %861 = vmatprep.subr.bf16.mxu0 0
    %862 = vmatpush1.bf16.msra.mxu0 %v842
    %863 = vmatprep.subr.bf16.mxu0 0
    %864 = vmatpush1.bf16.msra.mxu0 %v843
    %865 = vmatprep.subr.bf16.mxu0 0
    %866 = vmatpush1.bf16.msra.mxu0 %v844
    %867 = vmatprep.subr.bf16.mxu0 0
    %868 = vmatpush1.bf16.msra.mxu0 %v845
    %869 = vmatprep.subr.bf16.mxu0 0
    %870 = vmatpush1.bf16.msra.mxu0 %v846
    %871 = vmatprep.subr.bf16.mxu0 0
    %872 = vmatpush1.bf16.msra.mxu0 0
    %873 = vmatprep.subr.bf16.mxu0 0
    %874 = vmatpush1.bf16.msra.mxu0 0
    %875 = vmatprep.subr.bf16.mxu0 0
    %876 = vmatpush1.bf16.msra.mxu0 0
    %877 = vmatprep.subr.bf16.mxu0 0
    %878 = vmatpush1.bf16.msra.mxu0 0
    %879 = vmatprep.subr.bf16.mxu0 0
    %880 = vmatpush1.bf16.msra.mxu0 0
    %881 = vmatprep.subr.bf16.mxu0 0
    %882 = vmatpush1.bf16.msra.mxu0 0
    %883 = vmatprep.subr.bf16.mxu0 0
    %884 = vmatpush1.bf16.msra.mxu0 0
    %885 = vmatprep.subr.bf16.mxu0 0
    %886 = vmatpush1.bf16.msra.mxu0 0
    %887 = vmatprep.mubr.bf16.mxu0 0
    %888 = vmatmul.mubr.bf16.gmra.mrb[0].mxu0 %v799
    %v889 = vpop.f32.mrb[0].mxu0
    %v890 = vadd.f32 0.0, %v889
    %v891 = vpop.f32.mrb[0].mxu0
    %v892 = vpop.f32.mrb[0].mxu0
    %v893 = vadd.f32 0.0, %v892
    %v894 = vpop.f32.mrb[0].mxu0
    %895 = vmatprep.mubr.bf16.mxu0 0
    %896 = vmatmul.mubr.bf16.gmra.mrb[0].mxu0 %v800
    %v897 = vpop.f32.mrb[0].mxu0
    %v898 = vadd.f32 0.0, %v897
    %v899 = vpop.f32.mrb[0].mxu0
    %v900 = vpop.f32.mrb[0].mxu0
    %v901 = vadd.f32 0.0, %v900
    %v902 = vpop.f32.mrb[0].mxu0
    %903 = vmatprep.mubr.bf16.mxu0 0
    %904 = vmatmul.mubr.bf16.gmra.mrb[0].mxu0 %v801
    %v905 = vpop.f32.mrb[0].mxu0
    %v906 = vadd.f32 0.0, %v905
    %v907 = vpop.f32.mrb[0].mxu0
    %v908 = vpop.f32.mrb[0].mxu0
    %v909 = vadd.f32 0.0, %v908
    %v910 = vpop.f32.mrb[0].mxu0
    %911 = vmatprep.mubr.bf16.mxu0 0
    %912 = vmatmul.mubr.bf16.gmra.mrb[0].mxu0 %v802
    %v913 = vpop.f32.mrb[0].mxu0
    %v914 = vadd.f32 0.0, %v913
    %v915 = vpop.f32.mrb[0].mxu0
    %v916 = vpop.f32.mrb[0].mxu0
    %v917 = vadd.f32 0.0, %v916
    %v918 = vpop.f32.mrb[0].mxu0
    %919 = vmatprep.mubr.bf16.mxu0 0
    %920 = vmatmul.mubr.bf16.gmra.mrb[0].mxu0 %v803
    %v921 = vpop.f32.mrb[0].mxu0
    %v922 = vadd.f32 0.0, %v921
    %v923 = vpop.f32.mrb[0].mxu0
    %v924 = vpop.f32.mrb[0].mxu0
    %v925 = vadd.f32 0.0, %v924
    %v926 = vpop.f32.mrb[0].mxu0
    %927 = vmatprep.mubr.bf16.mxu0 0
    %928 = vmatmul.mubr.bf16.gmra.mrb[0].mxu0 %v804
    %v929 = vpop.f32.mrb[0].mxu0
    %v930 = vadd.f32 0.0, %v929
    %v931 = vpop.f32.mrb[0].mxu0
    %v932 = vpop.f32.mrb[0].mxu0
    %v933 = vadd.f32 0.0, %v932
    %v934 = vpop.f32.mrb[0].mxu0
    %935 = vmatprep.mubr.bf16.mxu0 0
    %936 = vmatmul.mubr.bf16.gmra.mrb[0].mxu0 %v805
    %v937 = vpop.f32.mrb[0].mxu0
    %v938 = vadd.f32 0.0, %v937
    %v939 = vpop.f32.mrb[0].mxu0
    %v940 = vpop.f32.mrb[0].mxu0
    %v941 = vadd.f32 0.0, %v940
    %v942 = vpop.f32.mrb[0].mxu0
    %943 = vmatprep.mubr.bf16.mxu0 0
    %944 = vmatmul.mubr.bf16.gmra.mrb[0].mxu0 %v806
    %v945 = vpop.f32.mrb[0].mxu0
    %v946 = vadd.f32 0.0, %v945
    %v947 = vpop.f32.mrb[0].mxu0
    %v948 = vpop.f32.mrb[0].mxu0
    %v949 = vadd.f32 0.0, %v948
    %v950 = vpop.f32.mrb[0].mxu0
    %951 = vdwg.mxu0
    %v952 = vsel %vm268, %v890, -inf
    %953 = vmax.xlane.f32.xlu0 %v952
    %v954 = vpop.xlane.xlu0 %953
    %v955 = vsel %vm268, %v893, -inf
    %956 = vmax.xlane.f32.xlu0 %v955
    %v957 = vpop.xlane.xlu0 %956
    %v958 = vsel %vm268, %v898, -inf
    %959 = vmax.xlane.f32.xlu0 %v958
    %v960 = vpop.xlane.xlu0 %959
    %v961 = vsel %vm268, %v901, -inf
    %962 = vmax.xlane.f32.xlu0 %v961
    %v963 = vpop.xlane.xlu0 %962
    %v964 = vsel %vm268, %v906, -inf
    %965 = vmax.xlane.f32.xlu0 %v964
    %v966 = vpop.xlane.xlu0 %965
    %v967 = vsel %vm268, %v909, -inf
    %968 = vmax.xlane.f32.xlu0 %v967
    %v969 = vpop.xlane.xlu0 %968
    %v970 = vsel %vm268, %v914, -inf
    %971 = vmax.xlane.f32.xlu0 %v970
    %v972 = vpop.xlane.xlu0 %971
    %v973 = vsel %vm268, %v917, -inf
    %974 = vmax.xlane.f32.xlu0 %v973
    %v975 = vpop.xlane.xlu0 %974
    %v976 = vsel %vm268, %v922, -inf
    %977 = vmax.xlane.f32.xlu0 %v976
    %v978 = vpop.xlane.xlu0 %977
    %v979 = vsel %vm268, %v925, -inf
    %980 = vmax.xlane.f32.xlu0 %v979
    %v981 = vpop.xlane.xlu0 %980
    %v982 = vsel %vm268, %v930, -inf
    %983 = vmax.xlane.f32.xlu0 %v982
    %v984 = vpop.xlane.xlu0 %983
    %v985 = vsel %vm268, %v933, -inf
    %986 = vmax.xlane.f32.xlu0 %v985
    %v987 = vpop.xlane.xlu0 %986
    %v988 = vsel %vm268, %v938, -inf
    %989 = vmax.xlane.f32.xlu0 %v988
    %v990 = vpop.xlane.xlu0 %989
    %v991 = vsel %vm268, %v941, -inf
    %992 = vmax.xlane.f32.xlu0 %v991
    %v993 = vpop.xlane.xlu0 %992
    %v994 = vsel %vm268, %v946, -inf
    %995 = vmax.xlane.f32.xlu0 %v994
    %v996 = vpop.xlane.xlu0 %995
    %v997 = vsel %vm268, %v949, -inf
    %998 = vmax.xlane.f32.xlu0 %v997
    %v999 = vpop.xlane.xlu0 %998
    %v1000 = vsub.f32 %v890, %v954
    %v1001 = vsub.f32 %v893, %v957
    %v1002 = vsub.f32 %v898, %v960
    %v1003 = vsub.f32 %v901, %v963
    %v1004 = vsub.f32 %v906, %v966
    %v1005 = vsub.f32 %v909, %v969
    %v1006 = vsub.f32 %v914, %v972
    %v1007 = vsub.f32 %v917, %v975
    %v1008 = vsub.f32 %v922, %v978
    %v1009 = vsub.f32 %v925, %v981
    %v1010 = vsub.f32 %v930, %v984
    %v1011 = vsub.f32 %v933, %v987
    %v1012 = vsub.f32 %v938, %v990
    %v1013 = vsub.f32 %v941, %v993
    %v1014 = vsub.f32 %v946, %v996
    %v1015 = vsub.f32 %v949, %v999
    %v1016 = vmul.f32 %v1000, 1.442695
    %v1017 = vpow.pop %v1016
    %v1018 = vmul.f32 %v1001, 1.442695
    %v1019 = vpow.pop %v1018
    %v1020 = vmul.f32 %v1002, 1.442695
    %v1021 = vpow.pop %v1020
    %v1022 = vmul.f32 %v1003, 1.442695
    %v1023 = vpow.pop %v1022
    %v1024 = vmul.f32 %v1004, 1.442695
    %v1025 = vpow.pop %v1024
    %v1026 = vmul.f32 %v1005, 1.442695
    %v1027 = vpow.pop %v1026
    %v1028 = vmul.f32 %v1006, 1.442695
    %v1029 = vpow.pop %v1028
    %v1030 = vmul.f32 %v1007, 1.442695
    %v1031 = vpow.pop %v1030
    %v1032 = vmul.f32 %v1008, 1.442695
    %v1033 = vpow.pop %v1032
    %v1034 = vmul.f32 %v1009, 1.442695
    %v1035 = vpow.pop %v1034
    %v1036 = vmul.f32 %v1010, 1.442695
    %v1037 = vpow.pop %v1036
    %v1038 = vmul.f32 %v1011, 1.442695
    %v1039 = vpow.pop %v1038
    %v1040 = vmul.f32 %v1012, 1.442695
    %v1041 = vpow.pop %v1040
    %v1042 = vmul.f32 %v1013, 1.442695
    %v1043 = vpow.pop %v1042
    %v1044 = vmul.f32 %v1014, 1.442695
    %v1045 = vpow.pop %v1044
    %v1046 = vmul.f32 %v1015, 1.442695
    %v1047 = vpow.pop %v1046
    %v1048 = vsel %vm268, %v1017, 0.0
    %1049 = vadd.xlane.f32.xlu0 %v1048
    %v1050 = vpop.xlane.xlu0 %1049
    %v1051 = vsel %vm268, %v1019, 0.0
    %1052 = vadd.xlane.f32.xlu0 %v1051
    %v1053 = vpop.xlane.xlu0 %1052
    %v1054 = vsel %vm268, %v1021, 0.0
    %1055 = vadd.xlane.f32.xlu0 %v1054
    %v1056 = vpop.xlane.xlu0 %1055
    %v1057 = vsel %vm268, %v1023, 0.0
    %1058 = vadd.xlane.f32.xlu0 %v1057
    %v1059 = vpop.xlane.xlu0 %1058
    %v1060 = vsel %vm268, %v1025, 0.0
    %1061 = vadd.xlane.f32.xlu0 %v1060
    %v1062 = vpop.xlane.xlu0 %1061
    %v1063 = vsel %vm268, %v1027, 0.0
    %1064 = vadd.xlane.f32.xlu0 %v1063
    %v1065 = vpop.xlane.xlu0 %1064
    %v1066 = vsel %vm268, %v1029, 0.0
    %1067 = vadd.xlane.f32.xlu0 %v1066
    %v1068 = vpop.xlane.xlu0 %1067
    %v1069 = vsel %vm268, %v1031, 0.0
    %1070 = vadd.xlane.f32.xlu0 %v1069
    %v1071 = vpop.xlane.xlu0 %1070
    %v1072 = vsel %vm268, %v1033, 0.0
    %1073 = vadd.xlane.f32.xlu0 %v1072
    %v1074 = vpop.xlane.xlu0 %1073
    %v1075 = vsel %vm268, %v1035, 0.0
    %1076 = vadd.xlane.f32.xlu0 %v1075
    %v1077 = vpop.xlane.xlu0 %1076
    %v1078 = vsel %vm268, %v1037, 0.0
    %1079 = vadd.xlane.f32.xlu0 %v1078
    %v1080 = vpop.xlane.xlu0 %1079
    %v1081 = vsel %vm268, %v1039, 0.0
    %1082 = vadd.xlane.f32.xlu0 %v1081
    %v1083 = vpop.xlane.xlu0 %1082
    %v1084 = vsel %vm268, %v1041, 0.0
    %1085 = vadd.xlane.f32.xlu0 %v1084
    %v1086 = vpop.xlane.xlu0 %1085
    %v1087 = vsel %vm268, %v1043, 0.0
    %1088 = vadd.xlane.f32.xlu0 %v1087
    %v1089 = vpop.xlane.xlu0 %1088
    %v1090 = vsel %vm268, %v1045, 0.0
    %1091 = vadd.xlane.f32.xlu0 %v1090
    %v1092 = vpop.xlane.xlu0 %1091
    %v1093 = vsel %vm268, %v1047, 0.0
    %1094 = vadd.xlane.f32.xlu0 %v1093
    %v1095 = vpop.xlane.xlu0 %1094
    %v1096 = vrcp.pop %v1050
    %v1097 = vrcp.pop %v1053
    %v1098 = vrcp.pop %v1056
    %v1099 = vrcp.pop %v1059
    %v1100 = vrcp.pop %v1062
    %v1101 = vrcp.pop %v1065
    %v1102 = vrcp.pop %v1068
    %v1103 = vrcp.pop %v1071
    %v1104 = vrcp.pop %v1074
    %v1105 = vrcp.pop %v1077
    %v1106 = vrcp.pop %v1080
    %v1107 = vrcp.pop %v1083
    %v1108 = vrcp.pop %v1086
    %v1109 = vrcp.pop %v1089
    %v1110 = vrcp.pop %v1092
    %v1111 = vrcp.pop %v1095
    %v1112 = vmul.f32 %v1017, %v1096
    %v1113 = vmul.f32 %v1019, %v1097
    %v1114 = vmul.f32 %v1021, %v1098
    %v1115 = vmul.f32 %v1023, %v1099
    %v1116 = vmul.f32 %v1025, %v1100
    %v1117 = vmul.f32 %v1027, %v1101
    %v1118 = vmul.f32 %v1029, %v1102
    %v1119 = vmul.f32 %v1031, %v1103
    %v1120 = vmul.f32 %v1033, %v1104
    %v1121 = vmul.f32 %v1035, %v1105
    %v1122 = vmul.f32 %v1037, %v1106
    %v1123 = vmul.f32 %v1039, %v1107
    %v1124 = vmul.f32 %v1041, %v1108
    %v1125 = vmul.f32 %v1043, %v1109
    %v1126 = vmul.f32 %v1045, %v1110
    %v1127 = vmul.f32 %v1047, %v1111
    %v1128 = vpack.c.bf16 %v1113, %v1112
    %v1129 = vpack.c.bf16 %v1115, %v1114
    %v1130 = vpack.c.bf16 %v1117, %v1116
    %v1131 = vpack.c.bf16 %v1119, %v1118
    %v1132 = vpack.c.bf16 %v1121, %v1120
    %v1133 = vpack.c.bf16 %v1123, %v1122
    %v1134 = vpack.c.bf16 %v1125, %v1124
    %v1135 = vpack.c.bf16 %v1127, %v1126
    %v1137 = vsel %vm268, %v1128, 0
    %v1140 = vsel %vm268, %v1129, 0
    %v1143 = vsel %vm268, %v1130, 0
    %v1146 = vsel %vm268, %v1131, 0
    %v1149 = vsel %vm268, %v1132, 0
    %v1152 = vsel %vm268, %v1133, 0
    %v1155 = vsel %vm268, %v1134, 0
    %v1158 = vsel %vm268, %v1135, 0
    %1160 = vmatprep.subr.bf16.mxu0 0
    %1161 = vmatpush1.bf16.msra.mxu0 %v282
    %1162 = vmatprep.subr.bf16.mxu0 0
    %1163 = vmatpush1.bf16.msra.mxu0 0
    %1164 = vmatprep.subr.bf16.mxu0 0
    %1165 = vmatpush1.bf16.msra.mxu0 0
    %1166 = vmatprep.subr.bf16.mxu0 0
    %1167 = vmatpush1.bf16.msra.mxu0 0
    %1168 = vmatprep.subr.bf16.mxu0 0
    %1169 = vmatpush1.bf16.msra.mxu0 0
    %1170 = vmatprep.subr.bf16.mxu0 0
    %1171 = vmatpush1.bf16.msra.mxu0 0
    %1172 = vmatprep.subr.bf16.mxu0 0
    %1173 = vmatpush1.bf16.msra.mxu0 0
    %1174 = vmatprep.subr.bf16.mxu0 0
    %1175 = vmatpush1.bf16.msra.mxu0 0
    %1176 = vmatprep.subr.bf16.mxu0 0
    %1177 = vmatpush1.bf16.msra.mxu0 0
    %1178 = vmatprep.subr.bf16.mxu0 0
    %1179 = vmatpush1.bf16.msra.mxu0 0
    %1180 = vmatprep.subr.bf16.mxu0 0
    %1181 = vmatpush1.bf16.msra.mxu0 0
    %1182 = vmatprep.subr.bf16.mxu0 0
    %1183 = vmatpush1.bf16.msra.mxu0 0
    %1184 = vmatprep.subr.bf16.mxu0 0
    %1185 = vmatpush1.bf16.msra.mxu0 0
    %1186 = vmatprep.subr.bf16.mxu0 0
    %1187 = vmatpush1.bf16.msra.mxu0 0
    %1188 = vmatprep.subr.bf16.mxu0 0
    %1189 = vmatpush1.bf16.msra.mxu0 0
    %1190 = vmatprep.subr.bf16.mxu0 0
    %1191 = vmatpush1.bf16.msra.mxu0 0
    %1192 = vmatprep.mubr.bf16.mxu0 0
    %1193 = vmatmul.mubr.bf16.gmra.mrb[0].mxu0 %v1137
    %v1194 = vpop.f32.mrb[0].mxu0
    %v1195 = vadd.f32 0.0, %v1194
    %v1196 = vpop.f32.mrb[0].mxu0
    %v1197 = vpop.f32.mrb[0].mxu0
    %v1198 = vadd.f32 0.0, %v1197
    %v1199 = vpop.f32.mrb[0].mxu0
    %1200 = vmatprep.mubr.bf16.mxu0 0
    %1201 = vmatmul.mubr.bf16.gmra.mrb[0].mxu0 %v1140
    %v1202 = vpop.f32.mrb[0].mxu0
    %v1203 = vadd.f32 0.0, %v1202
    %v1204 = vpop.f32.mrb[0].mxu0
    %v1205 = vpop.f32.mrb[0].mxu0
    %v1206 = vadd.f32 0.0, %v1205
    %v1207 = vpop.f32.mrb[0].mxu0
    %1208 = vmatprep.mubr.bf16.mxu0 0
    %1209 = vmatmul.mubr.bf16.gmra.mrb[0].mxu0 %v1143
    %v1210 = vpop.f32.mrb[0].mxu0
    %v1211 = vadd.f32 0.0, %v1210
    %v1212 = vpop.f32.mrb[0].mxu0
    %v1213 = vpop.f32.mrb[0].mxu0
    %v1214 = vadd.f32 0.0, %v1213
    %v1215 = vpop.f32.mrb[0].mxu0
    %1216 = vmatprep.mubr.bf16.mxu0 0
    %1217 = vmatmul.mubr.bf16.gmra.mrb[0].mxu0 %v1146
    %v1218 = vpop.f32.mrb[0].mxu0
    %v1219 = vadd.f32 0.0, %v1218
    %v1220 = vpop.f32.mrb[0].mxu0
    %v1221 = vpop.f32.mrb[0].mxu0
    %v1222 = vadd.f32 0.0, %v1221
    %v1223 = vpop.f32.mrb[0].mxu0
    %1224 = vmatprep.mubr.bf16.mxu0 0
    %1225 = vmatmul.mubr.bf16.gmra.mrb[0].mxu0 %v1149
    %v1226 = vpop.f32.mrb[0].mxu0
    %v1227 = vadd.f32 0.0, %v1226
    %v1228 = vpop.f32.mrb[0].mxu0
    %v1229 = vpop.f32.mrb[0].mxu0
    %v1230 = vadd.f32 0.0, %v1229
    %v1231 = vpop.f32.mrb[0].mxu0
    %1232 = vmatprep.mubr.bf16.mxu0 0
    %1233 = vmatmul.mubr.bf16.gmra.mrb[0].mxu0 %v1152
    %v1234 = vpop.f32.mrb[0].mxu0
    %v1235 = vadd.f32 0.0, %v1234
    %v1236 = vpop.f32.mrb[0].mxu0
    %v1237 = vpop.f32.mrb[0].mxu0
    %v1238 = vadd.f32 0.0, %v1237
    %v1239 = vpop.f32.mrb[0].mxu0
    %1240 = vmatprep.mubr.bf16.mxu0 0
    %1241 = vmatmul.mubr.bf16.gmra.mrb[0].mxu0 %v1155
    %v1242 = vpop.f32.mrb[0].mxu0
    %v1243 = vadd.f32 0.0, %v1242
    %v1244 = vpop.f32.mrb[0].mxu0
    %v1245 = vpop.f32.mrb[0].mxu0
    %v1246 = vadd.f32 0.0, %v1245
    %v1247 = vpop.f32.mrb[0].mxu0
    %1248 = vmatprep.mubr.bf16.mxu0 0
    %1249 = vmatmul.mubr.bf16.gmra.mrb[0].mxu0 %v1158
    %v1250 = vpop.f32.mrb[0].mxu0
    %v1251 = vadd.f32 0.0, %v1250
    %v1252 = vpop.f32.mrb[0].mxu0
    %v1253 = vpop.f32.mrb[0].mxu0
    %v1254 = vadd.f32 0.0, %v1253
    %v1255 = vpop.f32.mrb[0].mxu0
    %1256 = vdwg.mxu0
    %v1257 = vmul.f32 %v1195, %v173
    %v1258 = vmul.f32 %v1198, %v176
    %v1259 = vmul.f32 %v1203, %v181
    %v1260 = vmul.f32 %v1206, %v184
    %v1261 = vmul.f32 %v1211, %v189
    %v1262 = vmul.f32 %v1214, %v192
    %v1263 = vmul.f32 %v1219, %v197
    %v1264 = vmul.f32 %v1222, %v200
    %v1265 = vmul.f32 %v1227, %v205
    %v1266 = vmul.f32 %v1230, %v208
    %v1267 = vmul.f32 %v1235, %v213
    %v1268 = vmul.f32 %v1238, %v216
    %v1269 = vmul.f32 %v1243, %v221
    %v1270 = vmul.f32 %v1246, %v224
    %v1271 = vmul.f32 %v1251, %v229
    %v1272 = vmul.f32 %v1254, %v232
    %v1273 = vrot.slane %v1257, 4
    %v1274 = vadd.f32 %v1257, %v1273
    %v1275 = vrot.slane %v1274, 2
    %v1276 = vadd.f32 %v1274, %v1275
    %v1277 = vrot.slane %v1276, 1
    %v1278 = vadd.f32 %v1276, %v1277
    %v1279 = vrot.slane %v1258, 4
    %v1280 = vadd.f32 %v1258, %v1279
    %v1281 = vrot.slane %v1280, 2
    %v1282 = vadd.f32 %v1280, %v1281
    %v1283 = vrot.slane %v1282, 1
    %v1284 = vadd.f32 %v1282, %v1283
    %v1285 = vrot.slane %v1259, 4
    %v1286 = vadd.f32 %v1259, %v1285
    %v1287 = vrot.slane %v1286, 2
    %v1288 = vadd.f32 %v1286, %v1287
    %v1289 = vrot.slane %v1288, 1
    %v1290 = vadd.f32 %v1288, %v1289
    %v1291 = vrot.slane %v1260, 4
    %v1292 = vadd.f32 %v1260, %v1291
    %v1293 = vrot.slane %v1292, 2
    %v1294 = vadd.f32 %v1292, %v1293
    %v1295 = vrot.slane %v1294, 1
    %v1296 = vadd.f32 %v1294, %v1295
    %v1297 = vrot.slane %v1261, 4
    %v1298 = vadd.f32 %v1261, %v1297
    %v1299 = vrot.slane %v1298, 2
    %v1300 = vadd.f32 %v1298, %v1299
    %v1301 = vrot.slane %v1300, 1
    %v1302 = vadd.f32 %v1300, %v1301
    %v1303 = vrot.slane %v1262, 4
    %v1304 = vadd.f32 %v1262, %v1303
    %v1305 = vrot.slane %v1304, 2
    %v1306 = vadd.f32 %v1304, %v1305
    %v1307 = vrot.slane %v1306, 1
    %v1308 = vadd.f32 %v1306, %v1307
    %v1309 = vrot.slane %v1263, 4
    %v1310 = vadd.f32 %v1263, %v1309
    %v1311 = vrot.slane %v1310, 2
    %v1312 = vadd.f32 %v1310, %v1311
    %v1313 = vrot.slane %v1312, 1
    %v1314 = vadd.f32 %v1312, %v1313
    %v1315 = vrot.slane %v1264, 4
    %v1316 = vadd.f32 %v1264, %v1315
    %v1317 = vrot.slane %v1316, 2
    %v1318 = vadd.f32 %v1316, %v1317
    %v1319 = vrot.slane %v1318, 1
    %v1320 = vadd.f32 %v1318, %v1319
    %v1321 = vrot.slane %v1265, 4
    %v1322 = vadd.f32 %v1265, %v1321
    %v1323 = vrot.slane %v1322, 2
    %v1324 = vadd.f32 %v1322, %v1323
    %v1325 = vrot.slane %v1324, 1
    %v1326 = vadd.f32 %v1324, %v1325
    %v1327 = vrot.slane %v1266, 4
    %v1328 = vadd.f32 %v1266, %v1327
    %v1329 = vrot.slane %v1328, 2
    %v1330 = vadd.f32 %v1328, %v1329
    %v1331 = vrot.slane %v1330, 1
    %v1332 = vadd.f32 %v1330, %v1331
    %v1333 = vrot.slane %v1267, 4
    %v1334 = vadd.f32 %v1267, %v1333
    %v1335 = vrot.slane %v1334, 2
    %v1336 = vadd.f32 %v1334, %v1335
    %v1337 = vrot.slane %v1336, 1
    %v1338 = vadd.f32 %v1336, %v1337
    %v1339 = vrot.slane %v1268, 4
    %v1340 = vadd.f32 %v1268, %v1339
    %v1341 = vrot.slane %v1340, 2
    %v1342 = vadd.f32 %v1340, %v1341
    %v1343 = vrot.slane %v1342, 1
    %v1344 = vadd.f32 %v1342, %v1343
    %v1345 = vrot.slane %v1269, 4
    %v1346 = vadd.f32 %v1269, %v1345
    %v1347 = vrot.slane %v1346, 2
    %v1348 = vadd.f32 %v1346, %v1347
    %v1349 = vrot.slane %v1348, 1
    %v1350 = vadd.f32 %v1348, %v1349
    %v1351 = vrot.slane %v1270, 4
    %v1352 = vadd.f32 %v1270, %v1351
    %v1353 = vrot.slane %v1352, 2
    %v1354 = vadd.f32 %v1352, %v1353
    %v1355 = vrot.slane %v1354, 1
    %v1356 = vadd.f32 %v1354, %v1355
    %v1357 = vrot.slane %v1271, 4
    %v1358 = vadd.f32 %v1271, %v1357
    %v1359 = vrot.slane %v1358, 2
    %v1360 = vadd.f32 %v1358, %v1359
    %v1361 = vrot.slane %v1360, 1
    %v1362 = vadd.f32 %v1360, %v1361
    %v1363 = vrot.slane %v1272, 4
    %v1364 = vadd.f32 %v1272, %v1363
    %v1365 = vrot.slane %v1364, 2
    %v1366 = vadd.f32 %v1364, %v1365
    %v1367 = vrot.slane %v1366, 1
    %v1368 = vadd.f32 %v1366, %v1367
    %v1369 = vmul.f32 %v1278, %v1278
    %v1370 = vmul.f32 %v1284, %v1284
    %v1371 = vmul.f32 %v1290, %v1290
    %v1372 = vmul.f32 %v1296, %v1296
    %v1373 = vmul.f32 %v1302, %v1302
    %v1374 = vmul.f32 %v1308, %v1308
    %v1375 = vmul.f32 %v1314, %v1314
    %v1376 = vmul.f32 %v1320, %v1320
    %v1377 = vmul.f32 %v1326, %v1326
    %v1378 = vmul.f32 %v1332, %v1332
    %v1379 = vmul.f32 %v1338, %v1338
    %v1380 = vmul.f32 %v1344, %v1344
    %v1381 = vmul.f32 %v1350, %v1350
    %v1382 = vmul.f32 %v1356, %v1356
    %v1383 = vmul.f32 %v1362, %v1362
    %v1384 = vmul.f32 %v1368, %v1368
    %v1385 = vpack.c.bf16 %v1369, %v1369
    %v1386 = vpack.c.bf16 %v1370, %v1370
    %v1387 = vpack.c.bf16 %v1371, %v1371
    %v1388 = vpack.c.bf16 %v1372, %v1372
    %v1389 = vpack.c.bf16 %v1373, %v1373
    %v1390 = vpack.c.bf16 %v1374, %v1374
    %v1391 = vpack.c.bf16 %v1375, %v1375
    %v1392 = vpack.c.bf16 %v1376, %v1376
    %v1393 = vpack.c.bf16 %v1377, %v1377
    %v1394 = vpack.c.bf16 %v1378, %v1378
    %v1395 = vpack.c.bf16 %v1379, %v1379
    %v1396 = vpack.c.bf16 %v1380, %v1380
    %v1397 = vpack.c.bf16 %v1381, %v1381
    %v1398 = vpack.c.bf16 %v1382, %v1382
    %v1399 = vpack.c.bf16 %v1383, %v1383
    %v1400 = vpack.c.bf16 %v1384, %v1384
    %v1417 = vunpack.c.l.b16 %v1385
    %v1418 = vunpack.c.l.b16 %v1386
    %v1419 = vunpack.c.l.b16 %v1387
    %v1420 = vunpack.c.l.b16 %v1388
    %v1421 = vunpack.c.l.b16 %v1389
    %v1422 = vunpack.c.l.b16 %v1390
    %v1423 = vunpack.c.l.b16 %v1391
    %v1424 = vunpack.c.l.b16 %v1392
    %v1425 = vunpack.c.l.b16 %v1393
    %v1426 = vunpack.c.l.b16 %v1394
    %v1427 = vunpack.c.l.b16 %v1395
    %v1428 = vunpack.c.l.b16 %v1396
    %v1429 = vunpack.c.l.b16 %v1397
    %v1430 = vunpack.c.l.b16 %v1398
    %v1431 = vunpack.c.l.b16 %v1399
    %v1432 = vunpack.c.l.b16 %v1400
    %v1433 = vsel %vm557, %v1418, %v1417
    %v1434 = vsel %vm559, %v1419, %v1433
    %v1435 = vsel %vm561, %v1420, %v1434
    %v1436 = vsel %vm563, %v1421, %v1435
    %v1437 = vsel %vm565, %v1422, %v1436
    %v1438 = vsel %vm567, %v1423, %v1437
    %v1439 = vsel %vm569, %v1424, %v1438
    %v1440 = vsel %vm557, %v1426, %v1425
    %v1441 = vsel %vm559, %v1427, %v1440
    %v1442 = vsel %vm561, %v1428, %v1441
    %v1443 = vsel %vm563, %v1429, %v1442
    %v1444 = vsel %vm565, %v1430, %v1443
    %v1445 = vsel %vm567, %v1431, %v1444
    %v1446 = vsel %vm569, %v1432, %v1445
    %v1447 = vpack.c.b16 %v1446, %v1439
    %1449 = vmatprep.subr.bf16.mxu0 0
    %1450 = vmatpush1.bf16.msra.mxu0 %v612
    %1451 = vmatprep.subr.bf16.mxu0 0
    %1452 = vmatpush1.bf16.msra.mxu0 %v613
    %1453 = vmatprep.subr.bf16.mxu0 0
    %1454 = vmatpush1.bf16.msra.mxu0 %v614
    %1455 = vmatprep.subr.bf16.mxu0 0
    %1456 = vmatpush1.bf16.msra.mxu0 %v615
    %1457 = vmatprep.subr.bf16.mxu0 0
    %1458 = vmatpush1.bf16.msra.mxu0 %v616
    %1459 = vmatprep.subr.bf16.mxu0 0
    %1460 = vmatpush1.bf16.msra.mxu0 %v617
    %1461 = vmatprep.subr.bf16.mxu0 0
    %1462 = vmatpush1.bf16.msra.mxu0 %v618
    %1463 = vmatprep.subr.bf16.mxu0 0
    %1464 = vmatpush1.bf16.msra.mxu0 %v619
    %1465 = vmatprep.subr.bf16.mxu0 0
    %1466 = vmatpush1.bf16.msra.mxu0 0
    %1467 = vmatprep.subr.bf16.mxu0 0
    %1468 = vmatpush1.bf16.msra.mxu0 0
    %1469 = vmatprep.subr.bf16.mxu0 0
    %1470 = vmatpush1.bf16.msra.mxu0 0
    %1471 = vmatprep.subr.bf16.mxu0 0
    %1472 = vmatpush1.bf16.msra.mxu0 0
    %1473 = vmatprep.subr.bf16.mxu0 0
    %1474 = vmatpush1.bf16.msra.mxu0 0
    %1475 = vmatprep.subr.bf16.mxu0 0
    %1476 = vmatpush1.bf16.msra.mxu0 0
    %1477 = vmatprep.subr.bf16.mxu0 0
    %1478 = vmatpush1.bf16.msra.mxu0 0
    %1479 = vmatprep.subr.bf16.mxu0 0
    %1480 = vmatpush1.bf16.msra.mxu0 0
    %1481 = vmatprep.mubr.bf16.mxu0 0
    %1482 = vmatmul.mubr.bf16.gmra.mrb[0].mxu0 %v1447
    %v1483 = vpop.f32.mrb[0].mxu0
    %v1484 = vadd.f32 1e-07, %v1483
    %v1485 = vpop.f32.mrb[0].mxu0
    %v1486 = vpop.f32.mrb[0].mxu0
    %v1487 = vadd.f32 1e-07, %v1486
    %v1488 = vpop.f32.mrb[0].mxu0
    %1489 = vdwg.mxu0
    %v1490 = vrsqrt.pop %v1484
    %v1491 = vrsqrt.pop %v1487
    %v1494 = vrot.slane %v1490, 1
    %v1495 = vrot.slane %v1490, 2
    %v1496 = vrot.slane %v1490, 3
    %v1497 = vrot.slane %v1490, 4
    %v1498 = vrot.slane %v1490, 5
    %v1499 = vrot.slane %v1490, 6
    %v1500 = vrot.slane %v1490, 7
    %v1501 = vrot.slane %v1491, 1
    %v1502 = vrot.slane %v1491, 2
    %v1503 = vrot.slane %v1491, 3
    %v1504 = vrot.slane %v1491, 4
    %v1505 = vrot.slane %v1491, 5
    %v1506 = vrot.slane %v1491, 6
    %v1507 = vrot.slane %v1491, 7
    %v1524 = vmul.f32 %v1278, %v1490
    %v1525 = vmul.f32 %v1284, %v1494
    %v1526 = vmul.f32 %v1290, %v1495
    %v1527 = vmul.f32 %v1296, %v1496
    %v1528 = vmul.f32 %v1302, %v1497
    %v1529 = vmul.f32 %v1308, %v1498
    %v1530 = vmul.f32 %v1314, %v1499
    %v1531 = vmul.f32 %v1320, %v1500
    %v1532 = vmul.f32 %v1326, %v1491
    %v1533 = vmul.f32 %v1332, %v1501
    %v1534 = vmul.f32 %v1338, %v1502
    %v1535 = vmul.f32 %v1344, %v1503
    %v1536 = vmul.f32 %v1350, %v1504
    %v1537 = vmul.f32 %v1356, %v1505
    %v1538 = vmul.f32 %v1362, %v1506
    %v1539 = vmul.f32 %v1368, %v1507
    %v1540 = vlaneseq
    %v1541 = vshrl.u32 %v1540, 7
    %v1542 = vsub.s32 0, %v1541
    %v1543 = vrot.slane %v1524, %v1542
    %v1544 = vlaneseq
    %v1545 = vshrl.u32 %v1544, 7
    %v1546 = vsub.s32 0, %v1545
    %v1547 = vrot.slane %v1525, %v1546
    %v1548 = vlaneseq
    %v1549 = vshrl.u32 %v1548, 7
    %v1550 = vsub.s32 0, %v1549
    %v1551 = vrot.slane %v1526, %v1550
    %v1552 = vlaneseq
    %v1553 = vshrl.u32 %v1552, 7
    %v1554 = vsub.s32 0, %v1553
    %v1555 = vrot.slane %v1527, %v1554
    %v1556 = vlaneseq
    %v1557 = vshrl.u32 %v1556, 7
    %v1558 = vsub.s32 0, %v1557
    %v1559 = vrot.slane %v1528, %v1558
    %v1560 = vlaneseq
    %v1561 = vshrl.u32 %v1560, 7
    %v1562 = vsub.s32 0, %v1561
    %v1563 = vrot.slane %v1529, %v1562
    %v1564 = vlaneseq
    %v1565 = vshrl.u32 %v1564, 7
    %v1566 = vsub.s32 0, %v1565
    %v1567 = vrot.slane %v1530, %v1566
    %v1568 = vlaneseq
    %v1569 = vshrl.u32 %v1568, 7
    %v1570 = vsub.s32 0, %v1569
    %v1571 = vrot.slane %v1531, %v1570
    %v1572 = vlaneseq
    %v1573 = vshrl.u32 %v1572, 7
    %v1574 = vsub.s32 0, %v1573
    %v1575 = vrot.slane %v1532, %v1574
    %v1576 = vlaneseq
    %v1577 = vshrl.u32 %v1576, 7
    %v1578 = vsub.s32 0, %v1577
    %v1579 = vrot.slane %v1533, %v1578
    %v1580 = vlaneseq
    %v1581 = vshrl.u32 %v1580, 7
    %v1582 = vsub.s32 0, %v1581
    %v1583 = vrot.slane %v1534, %v1582
    %v1584 = vlaneseq
    %v1585 = vshrl.u32 %v1584, 7
    %v1586 = vsub.s32 0, %v1585
    %v1587 = vrot.slane %v1535, %v1586
    %v1588 = vlaneseq
    %v1589 = vshrl.u32 %v1588, 7
    %v1590 = vsub.s32 0, %v1589
    %v1591 = vrot.slane %v1536, %v1590
    %v1592 = vlaneseq
    %v1593 = vshrl.u32 %v1592, 7
    %v1594 = vsub.s32 0, %v1593
    %v1595 = vrot.slane %v1537, %v1594
    %v1596 = vlaneseq
    %v1597 = vshrl.u32 %v1596, 7
    %v1598 = vsub.s32 0, %v1597
    %v1599 = vrot.slane %v1538, %v1598
    %v1600 = vlaneseq
    %v1601 = vshrl.u32 %v1600, 7
    %v1602 = vsub.s32 0, %v1601
    %v1603 = vrot.slane %v1539, %v1602
    %v1604 = vmul.f32 %v173, %v1543
    %v1605 = vmul.f32 %v176, %v1547
    %v1606 = vmul.f32 %v181, %v1551
    %v1607 = vmul.f32 %v184, %v1555
    %v1608 = vmul.f32 %v189, %v1559
    %v1609 = vmul.f32 %v192, %v1563
    %v1610 = vmul.f32 %v197, %v1567
    %v1611 = vmul.f32 %v200, %v1571
    %v1612 = vmul.f32 %v205, %v1575
    %v1613 = vmul.f32 %v208, %v1579
    %v1614 = vmul.f32 %v213, %v1583
    %v1615 = vmul.f32 %v216, %v1587
    %v1616 = vmul.f32 %v221, %v1591
    %v1617 = vmul.f32 %v224, %v1595
    %v1618 = vmul.f32 %v229, %v1599
    %v1619 = vmul.f32 %v232, %v1603
    %v1620 = vpack.c.bf16 %v1605, %v1604
    %v1621 = vpack.c.bf16 %v1607, %v1606
    %v1622 = vpack.c.bf16 %v1609, %v1608
    %v1623 = vpack.c.bf16 %v1611, %v1610
    %v1624 = vpack.c.bf16 %v1613, %v1612
    %v1625 = vpack.c.bf16 %v1615, %v1614
    %v1626 = vpack.c.bf16 %v1617, %v1616
    %v1627 = vpack.c.bf16 %v1619, %v1618
    %1628 = vmatprep.subr.bf16.mxu0 0
    %1629 = vmatpush1.bf16.msra.mxu0 %v839
    %1630 = vmatprep.subr.bf16.mxu0 0
    %1631 = vmatpush1.bf16.msra.mxu0 %v840
    %1632 = vmatprep.subr.bf16.mxu0 0
    %1633 = vmatpush1.bf16.msra.mxu0 %v841
    %1634 = vmatprep.subr.bf16.mxu0 0
    %1635 = vmatpush1.bf16.msra.mxu0 %v842
    %1636 = vmatprep.subr.bf16.mxu0 0
    %1637 = vmatpush1.bf16.msra.mxu0 %v843
    %1638 = vmatprep.subr.bf16.mxu0 0
    %1639 = vmatpush1.bf16.msra.mxu0 %v844
    %1640 = vmatprep.subr.bf16.mxu0 0
    %1641 = vmatpush1.bf16.msra.mxu0 %v845
    %1642 = vmatprep.subr.bf16.mxu0 0
    %1643 = vmatpush1.bf16.msra.mxu0 %v846
    %1644 = vmatprep.subr.bf16.mxu0 0
    %1645 = vmatpush1.bf16.msra.mxu0 0
    %1646 = vmatprep.subr.bf16.mxu0 0
    %1647 = vmatpush1.bf16.msra.mxu0 0
    %1648 = vmatprep.subr.bf16.mxu0 0
    %1649 = vmatpush1.bf16.msra.mxu0 0
    %1650 = vmatprep.subr.bf16.mxu0 0
    %1651 = vmatpush1.bf16.msra.mxu0 0
    %1652 = vmatprep.subr.bf16.mxu0 0
    %1653 = vmatpush1.bf16.msra.mxu0 0
    %1654 = vmatprep.subr.bf16.mxu0 0
    %1655 = vmatpush1.bf16.msra.mxu0 0
    %1656 = vmatprep.subr.bf16.mxu0 0
    %1657 = vmatpush1.bf16.msra.mxu0 0
    %1658 = vmatprep.subr.bf16.mxu0 0
    %1659 = vmatpush1.bf16.msra.mxu0 0
    %1660 = vmatprep.mubr.bf16.mxu0 0
    %1661 = vmatmul.mubr.bf16.gmra.mrb[0].mxu0 %v1620
    %v1662 = vpop.f32.mrb[0].mxu0
    %v1663 = vadd.f32 0.0, %v1662
    %v1664 = vpop.f32.mrb[0].mxu0
    %v1665 = vpop.f32.mrb[0].mxu0
    %v1666 = vadd.f32 0.0, %v1665
    %v1667 = vpop.f32.mrb[0].mxu0
    %1668 = vmatprep.mubr.bf16.mxu0 0
    %1669 = vmatmul.mubr.bf16.gmra.mrb[0].mxu0 %v1621
    %v1670 = vpop.f32.mrb[0].mxu0
    %v1671 = vadd.f32 0.0, %v1670
    %v1672 = vpop.f32.mrb[0].mxu0
    %v1673 = vpop.f32.mrb[0].mxu0
    %v1674 = vadd.f32 0.0, %v1673
    %v1675 = vpop.f32.mrb[0].mxu0
    %1676 = vmatprep.mubr.bf16.mxu0 0
    %1677 = vmatmul.mubr.bf16.gmra.mrb[0].mxu0 %v1622
    %v1678 = vpop.f32.mrb[0].mxu0
    %v1679 = vadd.f32 0.0, %v1678
    %v1680 = vpop.f32.mrb[0].mxu0
    %v1681 = vpop.f32.mrb[0].mxu0
    %v1682 = vadd.f32 0.0, %v1681
    %v1683 = vpop.f32.mrb[0].mxu0
    %1684 = vmatprep.mubr.bf16.mxu0 0
    %1685 = vmatmul.mubr.bf16.gmra.mrb[0].mxu0 %v1623
    %v1686 = vpop.f32.mrb[0].mxu0
    %v1687 = vadd.f32 0.0, %v1686
    %v1688 = vpop.f32.mrb[0].mxu0
    %v1689 = vpop.f32.mrb[0].mxu0
    %v1690 = vadd.f32 0.0, %v1689
    %v1691 = vpop.f32.mrb[0].mxu0
    %1692 = vmatprep.mubr.bf16.mxu0 0
    %1693 = vmatmul.mubr.bf16.gmra.mrb[0].mxu0 %v1624
    %v1694 = vpop.f32.mrb[0].mxu0
    %v1695 = vadd.f32 0.0, %v1694
    %v1696 = vpop.f32.mrb[0].mxu0
    %v1697 = vpop.f32.mrb[0].mxu0
    %v1698 = vadd.f32 0.0, %v1697
    %v1699 = vpop.f32.mrb[0].mxu0
    %1700 = vmatprep.mubr.bf16.mxu0 0
    %1701 = vmatmul.mubr.bf16.gmra.mrb[0].mxu0 %v1625
    %v1702 = vpop.f32.mrb[0].mxu0
    %v1703 = vadd.f32 0.0, %v1702
    %v1704 = vpop.f32.mrb[0].mxu0
    %v1705 = vpop.f32.mrb[0].mxu0
    %v1706 = vadd.f32 0.0, %v1705
    %v1707 = vpop.f32.mrb[0].mxu0
    %1708 = vmatprep.mubr.bf16.mxu0 0
    %1709 = vmatmul.mubr.bf16.gmra.mrb[0].mxu0 %v1626
    %v1710 = vpop.f32.mrb[0].mxu0
    %v1711 = vadd.f32 0.0, %v1710
    %v1712 = vpop.f32.mrb[0].mxu0
    %v1713 = vpop.f32.mrb[0].mxu0
    %v1714 = vadd.f32 0.0, %v1713
    %v1715 = vpop.f32.mrb[0].mxu0
    %1716 = vmatprep.mubr.bf16.mxu0 0
    %1717 = vmatmul.mubr.bf16.gmra.mrb[0].mxu0 %v1627
    %v1718 = vpop.f32.mrb[0].mxu0
    %v1719 = vadd.f32 0.0, %v1718
    %v1720 = vpop.f32.mrb[0].mxu0
    %v1721 = vpop.f32.mrb[0].mxu0
    %v1722 = vadd.f32 0.0, %v1721
    %v1723 = vpop.f32.mrb[0].mxu0
    %1724 = vdwg.mxu0
    %v1725 = vsel %vm268, %v1663, -inf
    %1726 = vmax.xlane.f32.xlu0 %v1725
    %v1727 = vpop.xlane.xlu0 %1726
    %v1728 = vsel %vm268, %v1666, -inf
    %1729 = vmax.xlane.f32.xlu0 %v1728
    %v1730 = vpop.xlane.xlu0 %1729
    %v1731 = vsel %vm268, %v1671, -inf
    %1732 = vmax.xlane.f32.xlu0 %v1731
    %v1733 = vpop.xlane.xlu0 %1732
    %v1734 = vsel %vm268, %v1674, -inf
    %1735 = vmax.xlane.f32.xlu0 %v1734
    %v1736 = vpop.xlane.xlu0 %1735
    %v1737 = vsel %vm268, %v1679, -inf
    %1738 = vmax.xlane.f32.xlu0 %v1737
    %v1739 = vpop.xlane.xlu0 %1738
    %v1740 = vsel %vm268, %v1682, -inf
    %1741 = vmax.xlane.f32.xlu0 %v1740
    %v1742 = vpop.xlane.xlu0 %1741
    %v1743 = vsel %vm268, %v1687, -inf
    %1744 = vmax.xlane.f32.xlu0 %v1743
    %v1745 = vpop.xlane.xlu0 %1744
    %v1746 = vsel %vm268, %v1690, -inf
    %1747 = vmax.xlane.f32.xlu0 %v1746
    %v1748 = vpop.xlane.xlu0 %1747
    %v1749 = vsel %vm268, %v1695, -inf
    %1750 = vmax.xlane.f32.xlu0 %v1749
    %v1751 = vpop.xlane.xlu0 %1750
    %v1752 = vsel %vm268, %v1698, -inf
    %1753 = vmax.xlane.f32.xlu0 %v1752
    %v1754 = vpop.xlane.xlu0 %1753
    %v1755 = vsel %vm268, %v1703, -inf
    %1756 = vmax.xlane.f32.xlu0 %v1755
    %v1757 = vpop.xlane.xlu0 %1756
    %v1758 = vsel %vm268, %v1706, -inf
    %1759 = vmax.xlane.f32.xlu0 %v1758
    %v1760 = vpop.xlane.xlu0 %1759
    %v1761 = vsel %vm268, %v1711, -inf
    %1762 = vmax.xlane.f32.xlu0 %v1761
    %v1763 = vpop.xlane.xlu0 %1762
    %v1764 = vsel %vm268, %v1714, -inf
    %1765 = vmax.xlane.f32.xlu0 %v1764
    %v1766 = vpop.xlane.xlu0 %1765
    %v1767 = vsel %vm268, %v1719, -inf
    %1768 = vmax.xlane.f32.xlu0 %v1767
    %v1769 = vpop.xlane.xlu0 %1768
    %v1770 = vsel %vm268, %v1722, -inf
    %1771 = vmax.xlane.f32.xlu0 %v1770
    %v1772 = vpop.xlane.xlu0 %1771
    %v1773 = vsub.f32 %v1663, %v1727
    %v1774 = vsub.f32 %v1666, %v1730
    %v1775 = vsub.f32 %v1671, %v1733
    %v1776 = vsub.f32 %v1674, %v1736
    %v1777 = vsub.f32 %v1679, %v1739
    %v1778 = vsub.f32 %v1682, %v1742
    %v1779 = vsub.f32 %v1687, %v1745
    %v1780 = vsub.f32 %v1690, %v1748
    %v1781 = vsub.f32 %v1695, %v1751
    %v1782 = vsub.f32 %v1698, %v1754
    %v1783 = vsub.f32 %v1703, %v1757
    %v1784 = vsub.f32 %v1706, %v1760
    %v1785 = vsub.f32 %v1711, %v1763
    %v1786 = vsub.f32 %v1714, %v1766
    %v1787 = vsub.f32 %v1719, %v1769
    %v1788 = vsub.f32 %v1722, %v1772
    %v1789 = vmul.f32 %v1773, 1.442695
    %v1790 = vpow.pop %v1789
    %v1791 = vmul.f32 %v1774, 1.442695
    %v1792 = vpow.pop %v1791
    %v1793 = vmul.f32 %v1775, 1.442695
    %v1794 = vpow.pop %v1793
    %v1795 = vmul.f32 %v1776, 1.442695
    %v1796 = vpow.pop %v1795
    %v1797 = vmul.f32 %v1777, 1.442695
    %v1798 = vpow.pop %v1797
    %v1799 = vmul.f32 %v1778, 1.442695
    %v1800 = vpow.pop %v1799
    %v1801 = vmul.f32 %v1779, 1.442695
    %v1802 = vpow.pop %v1801
    %v1803 = vmul.f32 %v1780, 1.442695
    %v1804 = vpow.pop %v1803
    %v1805 = vmul.f32 %v1781, 1.442695
    %v1806 = vpow.pop %v1805
    %v1807 = vmul.f32 %v1782, 1.442695
    %v1808 = vpow.pop %v1807
    %v1809 = vmul.f32 %v1783, 1.442695
    %v1810 = vpow.pop %v1809
    %v1811 = vmul.f32 %v1784, 1.442695
    %v1812 = vpow.pop %v1811
    %v1813 = vmul.f32 %v1785, 1.442695
    %v1814 = vpow.pop %v1813
    %v1815 = vmul.f32 %v1786, 1.442695
    %v1816 = vpow.pop %v1815
    %v1817 = vmul.f32 %v1787, 1.442695
    %v1818 = vpow.pop %v1817
    %v1819 = vmul.f32 %v1788, 1.442695
    %v1820 = vpow.pop %v1819
    %v1821 = vsel %vm268, %v1790, 0.0
    %1822 = vadd.xlane.f32.xlu0 %v1821
    %v1823 = vpop.xlane.xlu0 %1822
    %v1824 = vsel %vm268, %v1792, 0.0
    %1825 = vadd.xlane.f32.xlu0 %v1824
    %v1826 = vpop.xlane.xlu0 %1825
    %v1827 = vsel %vm268, %v1794, 0.0
    %1828 = vadd.xlane.f32.xlu0 %v1827
    %v1829 = vpop.xlane.xlu0 %1828
    %v1830 = vsel %vm268, %v1796, 0.0
    %1831 = vadd.xlane.f32.xlu0 %v1830
    %v1832 = vpop.xlane.xlu0 %1831
    %v1833 = vsel %vm268, %v1798, 0.0
    %1834 = vadd.xlane.f32.xlu0 %v1833
    %v1835 = vpop.xlane.xlu0 %1834
    %v1836 = vsel %vm268, %v1800, 0.0
    %1837 = vadd.xlane.f32.xlu0 %v1836
    %v1838 = vpop.xlane.xlu0 %1837
    %v1839 = vsel %vm268, %v1802, 0.0
    %1840 = vadd.xlane.f32.xlu0 %v1839
    %v1841 = vpop.xlane.xlu0 %1840
    %v1842 = vsel %vm268, %v1804, 0.0
    %1843 = vadd.xlane.f32.xlu0 %v1842
    %v1844 = vpop.xlane.xlu0 %1843
    %v1845 = vsel %vm268, %v1806, 0.0
    %1846 = vadd.xlane.f32.xlu0 %v1845
    %v1847 = vpop.xlane.xlu0 %1846
    %v1848 = vsel %vm268, %v1808, 0.0
    %1849 = vadd.xlane.f32.xlu0 %v1848
    %v1850 = vpop.xlane.xlu0 %1849
    %v1851 = vsel %vm268, %v1810, 0.0
    %1852 = vadd.xlane.f32.xlu0 %v1851
    %v1853 = vpop.xlane.xlu0 %1852
    %v1854 = vsel %vm268, %v1812, 0.0
    %1855 = vadd.xlane.f32.xlu0 %v1854
    %v1856 = vpop.xlane.xlu0 %1855
    %v1857 = vsel %vm268, %v1814, 0.0
    %1858 = vadd.xlane.f32.xlu0 %v1857
    %v1859 = vpop.xlane.xlu0 %1858
    %v1860 = vsel %vm268, %v1816, 0.0
    %1861 = vadd.xlane.f32.xlu0 %v1860
    %v1862 = vpop.xlane.xlu0 %1861
    %v1863 = vsel %vm268, %v1818, 0.0
    %1864 = vadd.xlane.f32.xlu0 %v1863
    %v1865 = vpop.xlane.xlu0 %1864
    %v1866 = vsel %vm268, %v1820, 0.0
    %1867 = vadd.xlane.f32.xlu0 %v1866
    %v1868 = vpop.xlane.xlu0 %1867
    %v1869 = vrcp.pop %v1823
    %v1870 = vrcp.pop %v1826
    %v1871 = vrcp.pop %v1829
    %v1872 = vrcp.pop %v1832
    %v1873 = vrcp.pop %v1835
    %v1874 = vrcp.pop %v1838
    %v1875 = vrcp.pop %v1841
    %v1876 = vrcp.pop %v1844
    %v1877 = vrcp.pop %v1847
    %v1878 = vrcp.pop %v1850
    %v1879 = vrcp.pop %v1853
    %v1880 = vrcp.pop %v1856
    %v1881 = vrcp.pop %v1859
    %v1882 = vrcp.pop %v1862
    %v1883 = vrcp.pop %v1865
    %v1884 = vrcp.pop %v1868
    %v1885 = vmul.f32 %v1790, %v1869
    %v1886 = vmul.f32 %v1792, %v1870
    %v1887 = vmul.f32 %v1794, %v1871
    %v1888 = vmul.f32 %v1796, %v1872
    %v1889 = vmul.f32 %v1798, %v1873
    %v1890 = vmul.f32 %v1800, %v1874
    %v1891 = vmul.f32 %v1802, %v1875
    %v1892 = vmul.f32 %v1804, %v1876
    %v1893 = vmul.f32 %v1806, %v1877
    %v1894 = vmul.f32 %v1808, %v1878
    %v1895 = vmul.f32 %v1810, %v1879
    %v1896 = vmul.f32 %v1812, %v1880
    %v1897 = vmul.f32 %v1814, %v1881
    %v1898 = vmul.f32 %v1816, %v1882
    %v1899 = vmul.f32 %v1818, %v1883
    %v1900 = vmul.f32 %v1820, %v1884
    %v1901 = vpack.c.bf16 %v1886, %v1885
    %v1902 = vpack.c.bf16 %v1888, %v1887
    %v1903 = vpack.c.bf16 %v1890, %v1889
    %v1904 = vpack.c.bf16 %v1892, %v1891
    %v1905 = vpack.c.bf16 %v1894, %v1893
    %v1906 = vpack.c.bf16 %v1896, %v1895
    %v1907 = vpack.c.bf16 %v1898, %v1897
    %v1908 = vpack.c.bf16 %v1900, %v1899
    %v1910 = vsel %vm268, %v1901, 0
    %v1913 = vsel %vm268, %v1902, 0
    %v1916 = vsel %vm268, %v1903, 0
    %v1919 = vsel %vm268, %v1904, 0
    %v1922 = vsel %vm268, %v1905, 0
    %v1925 = vsel %vm268, %v1906, 0
    %v1928 = vsel %vm268, %v1907, 0
    %v1931 = vsel %vm268, %v1908, 0
    %1933 = vmatprep.subr.bf16.mxu0 0
    %1934 = vmatpush1.bf16.msra.mxu0 %v282
    %1935 = vmatprep.subr.bf16.mxu0 0
    %1936 = vmatpush1.bf16.msra.mxu0 0
    %1937 = vmatprep.subr.bf16.mxu0 0
    %1938 = vmatpush1.bf16.msra.mxu0 0
    %1939 = vmatprep.subr.bf16.mxu0 0
    %1940 = vmatpush1.bf16.msra.mxu0 0
    %1941 = vmatprep.subr.bf16.mxu0 0
    %1942 = vmatpush1.bf16.msra.mxu0 0
    %1943 = vmatprep.subr.bf16.mxu0 0
    %1944 = vmatpush1.bf16.msra.mxu0 0
    %1945 = vmatprep.subr.bf16.mxu0 0
    %1946 = vmatpush1.bf16.msra.mxu0 0
    %1947 = vmatprep.subr.bf16.mxu0 0
    %1948 = vmatpush1.bf16.msra.mxu0 0
    %1949 = vmatprep.subr.bf16.mxu0 0
    %1950 = vmatpush1.bf16.msra.mxu0 0
    %1951 = vmatprep.subr.bf16.mxu0 0
    %1952 = vmatpush1.bf16.msra.mxu0 0
    %1953 = vmatprep.subr.bf16.mxu0 0
    %1954 = vmatpush1.bf16.msra.mxu0 0
    %1955 = vmatprep.subr.bf16.mxu0 0
    %1956 = vmatpush1.bf16.msra.mxu0 0
    %1957 = vmatprep.subr.bf16.mxu0 0
    %1958 = vmatpush1.bf16.msra.mxu0 0
    %1959 = vmatprep.subr.bf16.mxu0 0
    %1960 = vmatpush1.bf16.msra.mxu0 0
    %1961 = vmatprep.subr.bf16.mxu0 0
    %1962 = vmatpush1.bf16.msra.mxu0 0
    %1963 = vmatprep.subr.bf16.mxu0 0
    %1964 = vmatpush1.bf16.msra.mxu0 0
    %1965 = vmatprep.mubr.bf16.mxu0 0
    %1966 = vmatmul.mubr.bf16.gmra.mrb[0].mxu0 %v1910
    %v1967 = vpop.f32.mrb[0].mxu0
    %v1968 = vadd.f32 0.0, %v1967
    %v1969 = vpop.f32.mrb[0].mxu0
    %v1970 = vpop.f32.mrb[0].mxu0
    %v1971 = vadd.f32 0.0, %v1970
    %v1972 = vpop.f32.mrb[0].mxu0
    %1973 = vmatprep.mubr.bf16.mxu0 0
    %1974 = vmatmul.mubr.bf16.gmra.mrb[0].mxu0 %v1913
    %v1975 = vpop.f32.mrb[0].mxu0
    %v1976 = vadd.f32 0.0, %v1975
    %v1977 = vpop.f32.mrb[0].mxu0
    %v1978 = vpop.f32.mrb[0].mxu0
    %v1979 = vadd.f32 0.0, %v1978
    %v1980 = vpop.f32.mrb[0].mxu0
    %1981 = vmatprep.mubr.bf16.mxu0 0
    %1982 = vmatmul.mubr.bf16.gmra.mrb[0].mxu0 %v1916
    %v1983 = vpop.f32.mrb[0].mxu0
    %v1984 = vadd.f32 0.0, %v1983
    %v1985 = vpop.f32.mrb[0].mxu0
    %v1986 = vpop.f32.mrb[0].mxu0
    %v1987 = vadd.f32 0.0, %v1986
    %v1988 = vpop.f32.mrb[0].mxu0
    %1989 = vmatprep.mubr.bf16.mxu0 0
    %1990 = vmatmul.mubr.bf16.gmra.mrb[0].mxu0 %v1919
    %v1991 = vpop.f32.mrb[0].mxu0
    %v1992 = vadd.f32 0.0, %v1991
    %v1993 = vpop.f32.mrb[0].mxu0
    %v1994 = vpop.f32.mrb[0].mxu0
    %v1995 = vadd.f32 0.0, %v1994
    %v1996 = vpop.f32.mrb[0].mxu0
    %1997 = vmatprep.mubr.bf16.mxu0 0
    %1998 = vmatmul.mubr.bf16.gmra.mrb[0].mxu0 %v1922
    %v1999 = vpop.f32.mrb[0].mxu0
    %v2000 = vadd.f32 0.0, %v1999
    %v2001 = vpop.f32.mrb[0].mxu0
    %v2002 = vpop.f32.mrb[0].mxu0
    %v2003 = vadd.f32 0.0, %v2002
    %v2004 = vpop.f32.mrb[0].mxu0
    %2005 = vmatprep.mubr.bf16.mxu0 0
    %2006 = vmatmul.mubr.bf16.gmra.mrb[0].mxu0 %v1925
    %v2007 = vpop.f32.mrb[0].mxu0
    %v2008 = vadd.f32 0.0, %v2007
    %v2009 = vpop.f32.mrb[0].mxu0
    %v2010 = vpop.f32.mrb[0].mxu0
    %v2011 = vadd.f32 0.0, %v2010
    %v2012 = vpop.f32.mrb[0].mxu0
    %2013 = vmatprep.mubr.bf16.mxu0 0
    %2014 = vmatmul.mubr.bf16.gmra.mrb[0].mxu0 %v1928
    %v2015 = vpop.f32.mrb[0].mxu0
    %v2016 = vadd.f32 0.0, %v2015
    %v2017 = vpop.f32.mrb[0].mxu0
    %v2018 = vpop.f32.mrb[0].mxu0
    %v2019 = vadd.f32 0.0, %v2018
    %v2020 = vpop.f32.mrb[0].mxu0
    %2021 = vmatprep.mubr.bf16.mxu0 0
    %2022 = vmatmul.mubr.bf16.gmra.mrb[0].mxu0 %v1931
    %v2023 = vpop.f32.mrb[0].mxu0
    %v2024 = vadd.f32 0.0, %v2023
    %v2025 = vpop.f32.mrb[0].mxu0
    %v2026 = vpop.f32.mrb[0].mxu0
    %v2027 = vadd.f32 0.0, %v2026
    %v2028 = vpop.f32.mrb[0].mxu0
    %2029 = vdwg.mxu0
    %v2030 = vmul.f32 %v1968, %v173
    %v2031 = vmul.f32 %v1971, %v176
    %v2032 = vmul.f32 %v1976, %v181
    %v2033 = vmul.f32 %v1979, %v184
    %v2034 = vmul.f32 %v1984, %v189
    %v2035 = vmul.f32 %v1987, %v192
    %v2036 = vmul.f32 %v1992, %v197
    %v2037 = vmul.f32 %v1995, %v200
    %v2038 = vmul.f32 %v2000, %v205
    %v2039 = vmul.f32 %v2003, %v208
    %v2040 = vmul.f32 %v2008, %v213
    %v2041 = vmul.f32 %v2011, %v216
    %v2042 = vmul.f32 %v2016, %v221
    %v2043 = vmul.f32 %v2019, %v224
    %v2044 = vmul.f32 %v2024, %v229
    %v2045 = vmul.f32 %v2027, %v232
    %v2046 = vrot.slane %v2030, 4
    %v2047 = vadd.f32 %v2030, %v2046
    %v2048 = vrot.slane %v2047, 2
    %v2049 = vadd.f32 %v2047, %v2048
    %v2050 = vrot.slane %v2049, 1
    %v2051 = vadd.f32 %v2049, %v2050
    %v2052 = vrot.slane %v2031, 4
    %v2053 = vadd.f32 %v2031, %v2052
    %v2054 = vrot.slane %v2053, 2
    %v2055 = vadd.f32 %v2053, %v2054
    %v2056 = vrot.slane %v2055, 1
    %v2057 = vadd.f32 %v2055, %v2056
    %v2058 = vrot.slane %v2032, 4
    %v2059 = vadd.f32 %v2032, %v2058
    %v2060 = vrot.slane %v2059, 2
    %v2061 = vadd.f32 %v2059, %v2060
    %v2062 = vrot.slane %v2061, 1
    %v2063 = vadd.f32 %v2061, %v2062
    %v2064 = vrot.slane %v2033, 4
    %v2065 = vadd.f32 %v2033, %v2064
    %v2066 = vrot.slane %v2065, 2
    %v2067 = vadd.f32 %v2065, %v2066
    %v2068 = vrot.slane %v2067, 1
    %v2069 = vadd.f32 %v2067, %v2068
    %v2070 = vrot.slane %v2034, 4
    %v2071 = vadd.f32 %v2034, %v2070
    %v2072 = vrot.slane %v2071, 2
    %v2073 = vadd.f32 %v2071, %v2072
    %v2074 = vrot.slane %v2073, 1
    %v2075 = vadd.f32 %v2073, %v2074
    %v2076 = vrot.slane %v2035, 4
    %v2077 = vadd.f32 %v2035, %v2076
    %v2078 = vrot.slane %v2077, 2
    %v2079 = vadd.f32 %v2077, %v2078
    %v2080 = vrot.slane %v2079, 1
    %v2081 = vadd.f32 %v2079, %v2080
    %v2082 = vrot.slane %v2036, 4
    %v2083 = vadd.f32 %v2036, %v2082
    %v2084 = vrot.slane %v2083, 2
    %v2085 = vadd.f32 %v2083, %v2084
    %v2086 = vrot.slane %v2085, 1
    %v2087 = vadd.f32 %v2085, %v2086
    %v2088 = vrot.slane %v2037, 4
    %v2089 = vadd.f32 %v2037, %v2088
    %v2090 = vrot.slane %v2089, 2
    %v2091 = vadd.f32 %v2089, %v2090
    %v2092 = vrot.slane %v2091, 1
    %v2093 = vadd.f32 %v2091, %v2092
    %v2094 = vrot.slane %v2038, 4
    %v2095 = vadd.f32 %v2038, %v2094
    %v2096 = vrot.slane %v2095, 2
    %v2097 = vadd.f32 %v2095, %v2096
    %v2098 = vrot.slane %v2097, 1
    %v2099 = vadd.f32 %v2097, %v2098
    %v2100 = vrot.slane %v2039, 4
    %v2101 = vadd.f32 %v2039, %v2100
    %v2102 = vrot.slane %v2101, 2
    %v2103 = vadd.f32 %v2101, %v2102
    %v2104 = vrot.slane %v2103, 1
    %v2105 = vadd.f32 %v2103, %v2104
    %v2106 = vrot.slane %v2040, 4
    %v2107 = vadd.f32 %v2040, %v2106
    %v2108 = vrot.slane %v2107, 2
    %v2109 = vadd.f32 %v2107, %v2108
    %v2110 = vrot.slane %v2109, 1
    %v2111 = vadd.f32 %v2109, %v2110
    %v2112 = vrot.slane %v2041, 4
    %v2113 = vadd.f32 %v2041, %v2112
    %v2114 = vrot.slane %v2113, 2
    %v2115 = vadd.f32 %v2113, %v2114
    %v2116 = vrot.slane %v2115, 1
    %v2117 = vadd.f32 %v2115, %v2116
    %v2118 = vrot.slane %v2042, 4
    %v2119 = vadd.f32 %v2042, %v2118
    %v2120 = vrot.slane %v2119, 2
    %v2121 = vadd.f32 %v2119, %v2120
    %v2122 = vrot.slane %v2121, 1
    %v2123 = vadd.f32 %v2121, %v2122
    %v2124 = vrot.slane %v2043, 4
    %v2125 = vadd.f32 %v2043, %v2124
    %v2126 = vrot.slane %v2125, 2
    %v2127 = vadd.f32 %v2125, %v2126
    %v2128 = vrot.slane %v2127, 1
    %v2129 = vadd.f32 %v2127, %v2128
    %v2130 = vrot.slane %v2044, 4
    %v2131 = vadd.f32 %v2044, %v2130
    %v2132 = vrot.slane %v2131, 2
    %v2133 = vadd.f32 %v2131, %v2132
    %v2134 = vrot.slane %v2133, 1
    %v2135 = vadd.f32 %v2133, %v2134
    %v2136 = vrot.slane %v2045, 4
    %v2137 = vadd.f32 %v2045, %v2136
    %v2138 = vrot.slane %v2137, 2
    %v2139 = vadd.f32 %v2137, %v2138
    %v2140 = vrot.slane %v2139, 1
    %v2141 = vadd.f32 %v2139, %v2140
    %v2142 = vmul.f32 %v2051, %v2051
    %v2143 = vmul.f32 %v2057, %v2057
    %v2144 = vmul.f32 %v2063, %v2063
    %v2145 = vmul.f32 %v2069, %v2069
    %v2146 = vmul.f32 %v2075, %v2075
    %v2147 = vmul.f32 %v2081, %v2081
    %v2148 = vmul.f32 %v2087, %v2087
    %v2149 = vmul.f32 %v2093, %v2093
    %v2150 = vmul.f32 %v2099, %v2099
    %v2151 = vmul.f32 %v2105, %v2105
    %v2152 = vmul.f32 %v2111, %v2111
    %v2153 = vmul.f32 %v2117, %v2117
    %v2154 = vmul.f32 %v2123, %v2123
    %v2155 = vmul.f32 %v2129, %v2129
    %v2156 = vmul.f32 %v2135, %v2135
    %v2157 = vmul.f32 %v2141, %v2141
    %v2158 = vpack.c.bf16 %v2142, %v2142
    %v2159 = vpack.c.bf16 %v2143, %v2143
    %v2160 = vpack.c.bf16 %v2144, %v2144
    %v2161 = vpack.c.bf16 %v2145, %v2145
    %v2162 = vpack.c.bf16 %v2146, %v2146
    %v2163 = vpack.c.bf16 %v2147, %v2147
    %v2164 = vpack.c.bf16 %v2148, %v2148
    %v2165 = vpack.c.bf16 %v2149, %v2149
    %v2166 = vpack.c.bf16 %v2150, %v2150
    %v2167 = vpack.c.bf16 %v2151, %v2151
    %v2168 = vpack.c.bf16 %v2152, %v2152
    %v2169 = vpack.c.bf16 %v2153, %v2153
    %v2170 = vpack.c.bf16 %v2154, %v2154
    %v2171 = vpack.c.bf16 %v2155, %v2155
    %v2172 = vpack.c.bf16 %v2156, %v2156
    %v2173 = vpack.c.bf16 %v2157, %v2157
    %v2190 = vunpack.c.l.b16 %v2158
    %v2191 = vunpack.c.l.b16 %v2159
    %v2192 = vunpack.c.l.b16 %v2160
    %v2193 = vunpack.c.l.b16 %v2161
    %v2194 = vunpack.c.l.b16 %v2162
    %v2195 = vunpack.c.l.b16 %v2163
    %v2196 = vunpack.c.l.b16 %v2164
    %v2197 = vunpack.c.l.b16 %v2165
    %v2198 = vunpack.c.l.b16 %v2166
    %v2199 = vunpack.c.l.b16 %v2167
    %v2200 = vunpack.c.l.b16 %v2168
    %v2201 = vunpack.c.l.b16 %v2169
    %v2202 = vunpack.c.l.b16 %v2170
    %v2203 = vunpack.c.l.b16 %v2171
    %v2204 = vunpack.c.l.b16 %v2172
    %v2205 = vunpack.c.l.b16 %v2173
    %v2206 = vsel %vm557, %v2191, %v2190
    %v2207 = vsel %vm559, %v2192, %v2206
    %v2208 = vsel %vm561, %v2193, %v2207
    %v2209 = vsel %vm563, %v2194, %v2208
    %v2210 = vsel %vm565, %v2195, %v2209
    %v2211 = vsel %vm567, %v2196, %v2210
    %v2212 = vsel %vm569, %v2197, %v2211
    %v2213 = vsel %vm557, %v2199, %v2198
    %v2214 = vsel %vm559, %v2200, %v2213
    %v2215 = vsel %vm561, %v2201, %v2214
    %v2216 = vsel %vm563, %v2202, %v2215
    %v2217 = vsel %vm565, %v2203, %v2216
    %v2218 = vsel %vm567, %v2204, %v2217
    %v2219 = vsel %vm569, %v2205, %v2218
    %v2220 = vpack.c.b16 %v2219, %v2212
    %2222 = vmatprep.subr.bf16.mxu0 0
    %2223 = vmatpush1.bf16.msra.mxu0 %v612
    %2224 = vmatprep.subr.bf16.mxu0 0
    %2225 = vmatpush1.bf16.msra.mxu0 %v613
    %2226 = vmatprep.subr.bf16.mxu0 0
    %2227 = vmatpush1.bf16.msra.mxu0 %v614
    %2228 = vmatprep.subr.bf16.mxu0 0
    %2229 = vmatpush1.bf16.msra.mxu0 %v615
    %2230 = vmatprep.subr.bf16.mxu0 0
    %2231 = vmatpush1.bf16.msra.mxu0 %v616
    %2232 = vmatprep.subr.bf16.mxu0 0
    %2233 = vmatpush1.bf16.msra.mxu0 %v617
    %2234 = vmatprep.subr.bf16.mxu0 0
    %2235 = vmatpush1.bf16.msra.mxu0 %v618
    %2236 = vmatprep.subr.bf16.mxu0 0
    %2237 = vmatpush1.bf16.msra.mxu0 %v619
    %2238 = vmatprep.subr.bf16.mxu0 0
    %2239 = vmatpush1.bf16.msra.mxu0 0
    %2240 = vmatprep.subr.bf16.mxu0 0
    %2241 = vmatpush1.bf16.msra.mxu0 0
    %2242 = vmatprep.subr.bf16.mxu0 0
    %2243 = vmatpush1.bf16.msra.mxu0 0
    %2244 = vmatprep.subr.bf16.mxu0 0
    %2245 = vmatpush1.bf16.msra.mxu0 0
    %2246 = vmatprep.subr.bf16.mxu0 0
    %2247 = vmatpush1.bf16.msra.mxu0 0
    %2248 = vmatprep.subr.bf16.mxu0 0
    %2249 = vmatpush1.bf16.msra.mxu0 0
    %2250 = vmatprep.subr.bf16.mxu0 0
    %2251 = vmatpush1.bf16.msra.mxu0 0
    %2252 = vmatprep.subr.bf16.mxu0 0
    %2253 = vmatpush1.bf16.msra.mxu0 0
    %2254 = vmatprep.mubr.bf16.mxu0 0
    %2255 = vmatmul.mubr.bf16.gmra.mrb[0].mxu0 %v2220
    %v2256 = vpop.f32.mrb[0].mxu0
    %v2257 = vadd.f32 1e-07, %v2256
    %v2258 = vpop.f32.mrb[0].mxu0
    %v2259 = vpop.f32.mrb[0].mxu0
    %v2260 = vadd.f32 1e-07, %v2259
    %v2261 = vpop.f32.mrb[0].mxu0
    %2262 = vdwg.mxu0
    %v2263 = vrsqrt.pop %v2257
    %v2264 = vrsqrt.pop %v2260
    %v2267 = vrot.slane %v2263, 1
    %v2268 = vrot.slane %v2263, 2
    %v2269 = vrot.slane %v2263, 3
    %v2270 = vrot.slane %v2263, 4
    %v2271 = vrot.slane %v2263, 5
    %v2272 = vrot.slane %v2263, 6
    %v2273 = vrot.slane %v2263, 7
    %v2274 = vrot.slane %v2264, 1
    %v2275 = vrot.slane %v2264, 2
    %v2276 = vrot.slane %v2264, 3
    %v2277 = vrot.slane %v2264, 4
    %v2278 = vrot.slane %v2264, 5
    %v2279 = vrot.slane %v2264, 6
    %v2280 = vrot.slane %v2264, 7
    %v2297 = vmul.f32 %v2051, %v2263
    %v2298 = vmul.f32 %v2057, %v2267
    %v2299 = vmul.f32 %v2063, %v2268
    %v2300 = vmul.f32 %v2069, %v2269
    %v2301 = vmul.f32 %v2075, %v2270
    %v2302 = vmul.f32 %v2081, %v2271
    %v2303 = vmul.f32 %v2087, %v2272
    %v2304 = vmul.f32 %v2093, %v2273
    %v2305 = vmul.f32 %v2099, %v2264
    %v2306 = vmul.f32 %v2105, %v2274
    %v2307 = vmul.f32 %v2111, %v2275
    %v2308 = vmul.f32 %v2117, %v2276
    %v2309 = vmul.f32 %v2123, %v2277
    %v2310 = vmul.f32 %v2129, %v2278
    %v2311 = vmul.f32 %v2135, %v2279
    %v2312 = vmul.f32 %v2141, %v2280
    %v2313 = vlaneseq
    %v2314 = vshrl.u32 %v2313, 7
    %v2315 = vsub.s32 0, %v2314
    %v2316 = vrot.slane %v2297, %v2315
    %v2317 = vlaneseq
    %v2318 = vshrl.u32 %v2317, 7
    %v2319 = vsub.s32 0, %v2318
    %v2320 = vrot.slane %v2298, %v2319
    %v2321 = vlaneseq
    %v2322 = vshrl.u32 %v2321, 7
    %v2323 = vsub.s32 0, %v2322
    %v2324 = vrot.slane %v2299, %v2323
    %v2325 = vlaneseq
    %v2326 = vshrl.u32 %v2325, 7
    %v2327 = vsub.s32 0, %v2326
    %v2328 = vrot.slane %v2300, %v2327
    %v2329 = vlaneseq
    %v2330 = vshrl.u32 %v2329, 7
    %v2331 = vsub.s32 0, %v2330
    %v2332 = vrot.slane %v2301, %v2331
    %v2333 = vlaneseq
    %v2334 = vshrl.u32 %v2333, 7
    %v2335 = vsub.s32 0, %v2334
    %v2336 = vrot.slane %v2302, %v2335
    %v2337 = vlaneseq
    %v2338 = vshrl.u32 %v2337, 7
    %v2339 = vsub.s32 0, %v2338
    %v2340 = vrot.slane %v2303, %v2339
    %v2341 = vlaneseq
    %v2342 = vshrl.u32 %v2341, 7
    %v2343 = vsub.s32 0, %v2342
    %v2344 = vrot.slane %v2304, %v2343
    %v2345 = vlaneseq
    %v2346 = vshrl.u32 %v2345, 7
    %v2347 = vsub.s32 0, %v2346
    %v2348 = vrot.slane %v2305, %v2347
    %v2349 = vlaneseq
    %v2350 = vshrl.u32 %v2349, 7
    %v2351 = vsub.s32 0, %v2350
    %v2352 = vrot.slane %v2306, %v2351
    %v2353 = vlaneseq
    %v2354 = vshrl.u32 %v2353, 7
    %v2355 = vsub.s32 0, %v2354
    %v2356 = vrot.slane %v2307, %v2355
    %v2357 = vlaneseq
    %v2358 = vshrl.u32 %v2357, 7
    %v2359 = vsub.s32 0, %v2358
    %v2360 = vrot.slane %v2308, %v2359
    %v2361 = vlaneseq
    %v2362 = vshrl.u32 %v2361, 7
    %v2363 = vsub.s32 0, %v2362
    %v2364 = vrot.slane %v2309, %v2363
    %v2365 = vlaneseq
    %v2366 = vshrl.u32 %v2365, 7
    %v2367 = vsub.s32 0, %v2366
    %v2368 = vrot.slane %v2310, %v2367
    %v2369 = vlaneseq
    %v2370 = vshrl.u32 %v2369, 7
    %v2371 = vsub.s32 0, %v2370
    %v2372 = vrot.slane %v2311, %v2371
    %v2373 = vlaneseq
    %v2374 = vshrl.u32 %v2373, 7
    %v2375 = vsub.s32 0, %v2374
    %v2376 = vrot.slane %v2312, %v2375
    %v2377 = vmul.f32 %v173, %v2316
    %v2378 = vmul.f32 %v176, %v2320
    %v2379 = vmul.f32 %v181, %v2324
    %v2380 = vmul.f32 %v184, %v2328
    %v2381 = vmul.f32 %v189, %v2332
    %v2382 = vmul.f32 %v192, %v2336
    %v2383 = vmul.f32 %v197, %v2340
    %v2384 = vmul.f32 %v200, %v2344
    %v2385 = vmul.f32 %v205, %v2348
    %v2386 = vmul.f32 %v208, %v2352
    %v2387 = vmul.f32 %v213, %v2356
    %v2388 = vmul.f32 %v216, %v2360
    %v2389 = vmul.f32 %v221, %v2364
    %v2390 = vmul.f32 %v224, %v2368
    %v2391 = vmul.f32 %v229, %v2372
    %v2392 = vmul.f32 %v232, %v2376
    %v2393 = vpack.c.bf16 %v2378, %v2377
    %v2394 = vpack.c.bf16 %v2380, %v2379
    %v2395 = vpack.c.bf16 %v2382, %v2381
    %v2396 = vpack.c.bf16 %v2384, %v2383
    %v2397 = vpack.c.bf16 %v2386, %v2385
    %v2398 = vpack.c.bf16 %v2388, %v2387
    %v2399 = vpack.c.bf16 %v2390, %v2389
    %v2400 = vpack.c.bf16 %v2392, %v2391
    %2401 = vmatprep.subr.bf16.mxu0 0
    %2402 = vmatpush1.bf16.msra.mxu0 %v839
    %2403 = vmatprep.subr.bf16.mxu0 0
    %2404 = vmatpush1.bf16.msra.mxu0 %v840
    %2405 = vmatprep.subr.bf16.mxu0 0
    %2406 = vmatpush1.bf16.msra.mxu0 %v841
    %2407 = vmatprep.subr.bf16.mxu0 0
    %2408 = vmatpush1.bf16.msra.mxu0 %v842
    %2409 = vmatprep.subr.bf16.mxu0 0
    %2410 = vmatpush1.bf16.msra.mxu0 %v843
    %2411 = vmatprep.subr.bf16.mxu0 0
    %2412 = vmatpush1.bf16.msra.mxu0 %v844
    %2413 = vmatprep.subr.bf16.mxu0 0
    %2414 = vmatpush1.bf16.msra.mxu0 %v845
    %2415 = vmatprep.subr.bf16.mxu0 0
    %2416 = vmatpush1.bf16.msra.mxu0 %v846
    %2417 = vmatprep.subr.bf16.mxu0 0
    %2418 = vmatpush1.bf16.msra.mxu0 0
    %2419 = vmatprep.subr.bf16.mxu0 0
    %2420 = vmatpush1.bf16.msra.mxu0 0
    %2421 = vmatprep.subr.bf16.mxu0 0
    %2422 = vmatpush1.bf16.msra.mxu0 0
    %2423 = vmatprep.subr.bf16.mxu0 0
    %2424 = vmatpush1.bf16.msra.mxu0 0
    %2425 = vmatprep.subr.bf16.mxu0 0
    %2426 = vmatpush1.bf16.msra.mxu0 0
    %2427 = vmatprep.subr.bf16.mxu0 0
    %2428 = vmatpush1.bf16.msra.mxu0 0
    %2429 = vmatprep.subr.bf16.mxu0 0
    %2430 = vmatpush1.bf16.msra.mxu0 0
    %2431 = vmatprep.subr.bf16.mxu0 0
    %2432 = vmatpush1.bf16.msra.mxu0 0
    %2433 = vmatprep.mubr.bf16.mxu0 0
    %2434 = vmatmul.mubr.bf16.gmra.mrb[0].mxu0 %v2393
    %v2435 = vpop.f32.mrb[0].mxu0
    %v2436 = vadd.f32 0.0, %v2435
    %v2437 = vpop.f32.mrb[0].mxu0
    %v2438 = vpop.f32.mrb[0].mxu0
    %v2439 = vadd.f32 0.0, %v2438
    %v2440 = vpop.f32.mrb[0].mxu0
    %2441 = vmatprep.mubr.bf16.mxu0 0
    %2442 = vmatmul.mubr.bf16.gmra.mrb[0].mxu0 %v2394
    %v2443 = vpop.f32.mrb[0].mxu0
    %v2444 = vadd.f32 0.0, %v2443
    %v2445 = vpop.f32.mrb[0].mxu0
    %v2446 = vpop.f32.mrb[0].mxu0
    %v2447 = vadd.f32 0.0, %v2446
    %v2448 = vpop.f32.mrb[0].mxu0
    %2449 = vmatprep.mubr.bf16.mxu0 0
    %2450 = vmatmul.mubr.bf16.gmra.mrb[0].mxu0 %v2395
    %v2451 = vpop.f32.mrb[0].mxu0
    %v2452 = vadd.f32 0.0, %v2451
    %v2453 = vpop.f32.mrb[0].mxu0
    %v2454 = vpop.f32.mrb[0].mxu0
    %v2455 = vadd.f32 0.0, %v2454
    %v2456 = vpop.f32.mrb[0].mxu0
    %2457 = vmatprep.mubr.bf16.mxu0 0
    %2458 = vmatmul.mubr.bf16.gmra.mrb[0].mxu0 %v2396
    %v2459 = vpop.f32.mrb[0].mxu0
    %v2460 = vadd.f32 0.0, %v2459
    %v2461 = vpop.f32.mrb[0].mxu0
    %v2462 = vpop.f32.mrb[0].mxu0
    %v2463 = vadd.f32 0.0, %v2462
    %v2464 = vpop.f32.mrb[0].mxu0
    %2465 = vmatprep.mubr.bf16.mxu0 0
    %2466 = vmatmul.mubr.bf16.gmra.mrb[0].mxu0 %v2397
    %v2467 = vpop.f32.mrb[0].mxu0
    %v2468 = vadd.f32 0.0, %v2467
    %v2469 = vpop.f32.mrb[0].mxu0
    %v2470 = vpop.f32.mrb[0].mxu0
    %v2471 = vadd.f32 0.0, %v2470
    %v2472 = vpop.f32.mrb[0].mxu0
    %2473 = vmatprep.mubr.bf16.mxu0 0
    %2474 = vmatmul.mubr.bf16.gmra.mrb[0].mxu0 %v2398
    %v2475 = vpop.f32.mrb[0].mxu0
    %v2476 = vadd.f32 0.0, %v2475
    %v2477 = vpop.f32.mrb[0].mxu0
    %v2478 = vpop.f32.mrb[0].mxu0
    %v2479 = vadd.f32 0.0, %v2478
    %v2480 = vpop.f32.mrb[0].mxu0
    %2481 = vmatprep.mubr.bf16.mxu0 0
    %2482 = vmatmul.mubr.bf16.gmra.mrb[0].mxu0 %v2399
    %v2483 = vpop.f32.mrb[0].mxu0
    %v2484 = vadd.f32 0.0, %v2483
    %v2485 = vpop.f32.mrb[0].mxu0
    %v2486 = vpop.f32.mrb[0].mxu0
    %v2487 = vadd.f32 0.0, %v2486
    %v2488 = vpop.f32.mrb[0].mxu0
    %2489 = vmatprep.mubr.bf16.mxu0 0
    %2490 = vmatmul.mubr.bf16.gmra.mrb[0].mxu0 %v2400
    %v2491 = vpop.f32.mrb[0].mxu0
    %v2492 = vadd.f32 0.0, %v2491
    %v2493 = vpop.f32.mrb[0].mxu0
    %v2494 = vpop.f32.mrb[0].mxu0
    %v2495 = vadd.f32 0.0, %v2494
    %v2496 = vpop.f32.mrb[0].mxu0
    %2497 = vdwg.mxu0
    %v2498 = vsel %vm268, %v2436, -inf
    %2499 = vmax.xlane.f32.xlu0 %v2498
    %v2500 = vpop.xlane.xlu0 %2499
    %v2501 = vsel %vm268, %v2439, -inf
    %2502 = vmax.xlane.f32.xlu0 %v2501
    %v2503 = vpop.xlane.xlu0 %2502
    %v2504 = vsel %vm268, %v2444, -inf
    %2505 = vmax.xlane.f32.xlu0 %v2504
    %v2506 = vpop.xlane.xlu0 %2505
    %v2507 = vsel %vm268, %v2447, -inf
    %2508 = vmax.xlane.f32.xlu0 %v2507
    %v2509 = vpop.xlane.xlu0 %2508
    %v2510 = vsel %vm268, %v2452, -inf
    %2511 = vmax.xlane.f32.xlu0 %v2510
    %v2512 = vpop.xlane.xlu0 %2511
    %v2513 = vsel %vm268, %v2455, -inf
    %2514 = vmax.xlane.f32.xlu0 %v2513
    %v2515 = vpop.xlane.xlu0 %2514
    %v2516 = vsel %vm268, %v2460, -inf
    %2517 = vmax.xlane.f32.xlu0 %v2516
    %v2518 = vpop.xlane.xlu0 %2517
    %v2519 = vsel %vm268, %v2463, -inf
    %2520 = vmax.xlane.f32.xlu0 %v2519
    %v2521 = vpop.xlane.xlu0 %2520
    %v2522 = vsel %vm268, %v2468, -inf
    %2523 = vmax.xlane.f32.xlu0 %v2522
    %v2524 = vpop.xlane.xlu0 %2523
    %v2525 = vsel %vm268, %v2471, -inf
    %2526 = vmax.xlane.f32.xlu0 %v2525
    %v2527 = vpop.xlane.xlu0 %2526
    %v2528 = vsel %vm268, %v2476, -inf
    %2529 = vmax.xlane.f32.xlu0 %v2528
    %v2530 = vpop.xlane.xlu0 %2529
    %v2531 = vsel %vm268, %v2479, -inf
    %2532 = vmax.xlane.f32.xlu0 %v2531
    %v2533 = vpop.xlane.xlu0 %2532
    %v2534 = vsel %vm268, %v2484, -inf
    %2535 = vmax.xlane.f32.xlu0 %v2534
    %v2536 = vpop.xlane.xlu0 %2535
    %v2537 = vsel %vm268, %v2487, -inf
    %2538 = vmax.xlane.f32.xlu0 %v2537
    %v2539 = vpop.xlane.xlu0 %2538
    %v2540 = vsel %vm268, %v2492, -inf
    %2541 = vmax.xlane.f32.xlu0 %v2540
    %v2542 = vpop.xlane.xlu0 %2541
    %v2543 = vsel %vm268, %v2495, -inf
    %2544 = vmax.xlane.f32.xlu0 %v2543
    %v2545 = vpop.xlane.xlu0 %2544
    %v2546 = vsub.f32 %v2436, %v2500
    %v2547 = vsub.f32 %v2439, %v2503
    %v2548 = vsub.f32 %v2444, %v2506
    %v2549 = vsub.f32 %v2447, %v2509
    %v2550 = vsub.f32 %v2452, %v2512
    %v2551 = vsub.f32 %v2455, %v2515
    %v2552 = vsub.f32 %v2460, %v2518
    %v2553 = vsub.f32 %v2463, %v2521
    %v2554 = vsub.f32 %v2468, %v2524
    %v2555 = vsub.f32 %v2471, %v2527
    %v2556 = vsub.f32 %v2476, %v2530
    %v2557 = vsub.f32 %v2479, %v2533
    %v2558 = vsub.f32 %v2484, %v2536
    %v2559 = vsub.f32 %v2487, %v2539
    %v2560 = vsub.f32 %v2492, %v2542
    %v2561 = vsub.f32 %v2495, %v2545
    %v2562 = vmul.f32 %v2546, 1.442695
    %v2563 = vpow.pop %v2562
    %v2564 = vmul.f32 %v2547, 1.442695
    %v2565 = vpow.pop %v2564
    %v2566 = vmul.f32 %v2548, 1.442695
    %v2567 = vpow.pop %v2566
    %v2568 = vmul.f32 %v2549, 1.442695
    %v2569 = vpow.pop %v2568
    %v2570 = vmul.f32 %v2550, 1.442695
    %v2571 = vpow.pop %v2570
    %v2572 = vmul.f32 %v2551, 1.442695
    %v2573 = vpow.pop %v2572
    %v2574 = vmul.f32 %v2552, 1.442695
    %v2575 = vpow.pop %v2574
    %v2576 = vmul.f32 %v2553, 1.442695
    %v2577 = vpow.pop %v2576
    %v2578 = vmul.f32 %v2554, 1.442695
    %v2579 = vpow.pop %v2578
    %v2580 = vmul.f32 %v2555, 1.442695
    %v2581 = vpow.pop %v2580
    %v2582 = vmul.f32 %v2556, 1.442695
    %v2583 = vpow.pop %v2582
    %v2584 = vmul.f32 %v2557, 1.442695
    %v2585 = vpow.pop %v2584
    %v2586 = vmul.f32 %v2558, 1.442695
    %v2587 = vpow.pop %v2586
    %v2588 = vmul.f32 %v2559, 1.442695
    %v2589 = vpow.pop %v2588
    %v2590 = vmul.f32 %v2560, 1.442695
    %v2591 = vpow.pop %v2590
    %v2592 = vmul.f32 %v2561, 1.442695
    %v2593 = vpow.pop %v2592
    %v2594 = vsel %vm268, %v2563, 0.0
    %2595 = vadd.xlane.f32.xlu0 %v2594
    %v2596 = vpop.xlane.xlu0 %2595
    %v2597 = vsel %vm268, %v2565, 0.0
    %2598 = vadd.xlane.f32.xlu0 %v2597
    %v2599 = vpop.xlane.xlu0 %2598
    %v2600 = vsel %vm268, %v2567, 0.0
    %2601 = vadd.xlane.f32.xlu0 %v2600
    %v2602 = vpop.xlane.xlu0 %2601
    %v2603 = vsel %vm268, %v2569, 0.0
    %2604 = vadd.xlane.f32.xlu0 %v2603
    %v2605 = vpop.xlane.xlu0 %2604
    %v2606 = vsel %vm268, %v2571, 0.0
    %2607 = vadd.xlane.f32.xlu0 %v2606
    %v2608 = vpop.xlane.xlu0 %2607
    %v2609 = vsel %vm268, %v2573, 0.0
    %2610 = vadd.xlane.f32.xlu0 %v2609
    %v2611 = vpop.xlane.xlu0 %2610
    %v2612 = vsel %vm268, %v2575, 0.0
    %2613 = vadd.xlane.f32.xlu0 %v2612
    %v2614 = vpop.xlane.xlu0 %2613
    %v2615 = vsel %vm268, %v2577, 0.0
    %2616 = vadd.xlane.f32.xlu0 %v2615
    %v2617 = vpop.xlane.xlu0 %2616
    %v2618 = vsel %vm268, %v2579, 0.0
    %2619 = vadd.xlane.f32.xlu0 %v2618
    %v2620 = vpop.xlane.xlu0 %2619
    %v2621 = vsel %vm268, %v2581, 0.0
    %2622 = vadd.xlane.f32.xlu0 %v2621
    %v2623 = vpop.xlane.xlu0 %2622
    %v2624 = vsel %vm268, %v2583, 0.0
    %2625 = vadd.xlane.f32.xlu0 %v2624
    %v2626 = vpop.xlane.xlu0 %2625
    %v2627 = vsel %vm268, %v2585, 0.0
    %2628 = vadd.xlane.f32.xlu0 %v2627
    %v2629 = vpop.xlane.xlu0 %2628
    %v2630 = vsel %vm268, %v2587, 0.0
    %2631 = vadd.xlane.f32.xlu0 %v2630
    %v2632 = vpop.xlane.xlu0 %2631
    %v2633 = vsel %vm268, %v2589, 0.0
    %2634 = vadd.xlane.f32.xlu0 %v2633
    %v2635 = vpop.xlane.xlu0 %2634
    %v2636 = vsel %vm268, %v2591, 0.0
    %2637 = vadd.xlane.f32.xlu0 %v2636
    %v2638 = vpop.xlane.xlu0 %2637
    %v2639 = vsel %vm268, %v2593, 0.0
    %2640 = vadd.xlane.f32.xlu0 %v2639
    %v2641 = vpop.xlane.xlu0 %2640
    %v2642 = vrcp.pop %v2596
    %v2643 = vrcp.pop %v2599
    %v2644 = vrcp.pop %v2602
    %v2645 = vrcp.pop %v2605
    %v2646 = vrcp.pop %v2608
    %v2647 = vrcp.pop %v2611
    %v2648 = vrcp.pop %v2614
    %v2649 = vrcp.pop %v2617
    %v2650 = vrcp.pop %v2620
    %v2651 = vrcp.pop %v2623
    %v2652 = vrcp.pop %v2626
    %v2653 = vrcp.pop %v2629
    %v2654 = vrcp.pop %v2632
    %v2655 = vrcp.pop %v2635
    %v2656 = vrcp.pop %v2638
    %v2657 = vrcp.pop %v2641
    %v2658 = vmul.f32 %v2563, %v2642
    %v2659 = vmul.f32 %v2565, %v2643
    %v2660 = vmul.f32 %v2567, %v2644
    %v2661 = vmul.f32 %v2569, %v2645
    %v2662 = vmul.f32 %v2571, %v2646
    %v2663 = vmul.f32 %v2573, %v2647
    %v2664 = vmul.f32 %v2575, %v2648
    %v2665 = vmul.f32 %v2577, %v2649
    %v2666 = vmul.f32 %v2579, %v2650
    %v2667 = vmul.f32 %v2581, %v2651
    %v2668 = vmul.f32 %v2583, %v2652
    %v2669 = vmul.f32 %v2585, %v2653
    %v2670 = vmul.f32 %v2587, %v2654
    %v2671 = vmul.f32 %v2589, %v2655
    %v2672 = vmul.f32 %v2591, %v2656
    %v2673 = vmul.f32 %v2593, %v2657
    %v2674 = vpack.c.bf16 %v2659, %v2658
    %v2675 = vpack.c.bf16 %v2661, %v2660
    %v2676 = vpack.c.bf16 %v2663, %v2662
    %v2677 = vpack.c.bf16 %v2665, %v2664
    %v2678 = vpack.c.bf16 %v2667, %v2666
    %v2679 = vpack.c.bf16 %v2669, %v2668
    %v2680 = vpack.c.bf16 %v2671, %v2670
    %v2681 = vpack.c.bf16 %v2673, %v2672
    %v2683 = vsel %vm268, %v2674, 0
    %v2686 = vsel %vm268, %v2675, 0
    %v2689 = vsel %vm268, %v2676, 0
    %v2692 = vsel %vm268, %v2677, 0
    %v2695 = vsel %vm268, %v2678, 0
    %v2698 = vsel %vm268, %v2679, 0
    %v2701 = vsel %vm268, %v2680, 0
    %v2704 = vsel %vm268, %v2681, 0
    %2706 = vmatprep.subr.bf16.mxu0 0
    %2707 = vmatpush1.bf16.msra.mxu0 %v282
    %2708 = vmatprep.subr.bf16.mxu0 0
    %2709 = vmatpush1.bf16.msra.mxu0 0
    %2710 = vmatprep.subr.bf16.mxu0 0
    %2711 = vmatpush1.bf16.msra.mxu0 0
    %2712 = vmatprep.subr.bf16.mxu0 0
    %2713 = vmatpush1.bf16.msra.mxu0 0
    %2714 = vmatprep.subr.bf16.mxu0 0
    %2715 = vmatpush1.bf16.msra.mxu0 0
    %2716 = vmatprep.subr.bf16.mxu0 0
    %2717 = vmatpush1.bf16.msra.mxu0 0
    %2718 = vmatprep.subr.bf16.mxu0 0
    %2719 = vmatpush1.bf16.msra.mxu0 0
    %2720 = vmatprep.subr.bf16.mxu0 0
    %2721 = vmatpush1.bf16.msra.mxu0 0
    %2722 = vmatprep.subr.bf16.mxu0 0
    %2723 = vmatpush1.bf16.msra.mxu0 0
    %2724 = vmatprep.subr.bf16.mxu0 0
    %2725 = vmatpush1.bf16.msra.mxu0 0
    %2726 = vmatprep.subr.bf16.mxu0 0
    %2727 = vmatpush1.bf16.msra.mxu0 0
    %2728 = vmatprep.subr.bf16.mxu0 0
    %2729 = vmatpush1.bf16.msra.mxu0 0
    %2730 = vmatprep.subr.bf16.mxu0 0
    %2731 = vmatpush1.bf16.msra.mxu0 0
    %2732 = vmatprep.subr.bf16.mxu0 0
    %2733 = vmatpush1.bf16.msra.mxu0 0
    %2734 = vmatprep.subr.bf16.mxu0 0
    %2735 = vmatpush1.bf16.msra.mxu0 0
    %2736 = vmatprep.subr.bf16.mxu0 0
    %2737 = vmatpush1.bf16.msra.mxu0 0
    %2738 = vmatprep.mubr.bf16.mxu0 0
    %2739 = vmatmul.mubr.bf16.gmra.mrb[0].mxu0 %v2683
    %v2740 = vpop.f32.mrb[0].mxu0
    %v2741 = vadd.f32 0.0, %v2740
    %v2742 = vpop.f32.mrb[0].mxu0
    %v2743 = vpop.f32.mrb[0].mxu0
    %v2744 = vadd.f32 0.0, %v2743
    %v2745 = vpop.f32.mrb[0].mxu0
    %2746 = vmatprep.mubr.bf16.mxu0 0
    %2747 = vmatmul.mubr.bf16.gmra.mrb[0].mxu0 %v2686
    %v2748 = vpop.f32.mrb[0].mxu0
    %v2749 = vadd.f32 0.0, %v2748
    %v2750 = vpop.f32.mrb[0].mxu0
    %v2751 = vpop.f32.mrb[0].mxu0
    %v2752 = vadd.f32 0.0, %v2751
    %v2753 = vpop.f32.mrb[0].mxu0
    %2754 = vmatprep.mubr.bf16.mxu0 0
    %2755 = vmatmul.mubr.bf16.gmra.mrb[0].mxu0 %v2689
    %v2756 = vpop.f32.mrb[0].mxu0
    %v2757 = vadd.f32 0.0, %v2756
    %v2758 = vpop.f32.mrb[0].mxu0
    %v2759 = vpop.f32.mrb[0].mxu0
    %v2760 = vadd.f32 0.0, %v2759
    %v2761 = vpop.f32.mrb[0].mxu0
    %2762 = vmatprep.mubr.bf16.mxu0 0
    %2763 = vmatmul.mubr.bf16.gmra.mrb[0].mxu0 %v2692
    %v2764 = vpop.f32.mrb[0].mxu0
    %v2765 = vadd.f32 0.0, %v2764
    %v2766 = vpop.f32.mrb[0].mxu0
    %v2767 = vpop.f32.mrb[0].mxu0
    %v2768 = vadd.f32 0.0, %v2767
    %v2769 = vpop.f32.mrb[0].mxu0
    %2770 = vmatprep.mubr.bf16.mxu0 0
    %2771 = vmatmul.mubr.bf16.gmra.mrb[0].mxu0 %v2695
    %v2772 = vpop.f32.mrb[0].mxu0
    %v2773 = vadd.f32 0.0, %v2772
    %v2774 = vpop.f32.mrb[0].mxu0
    %v2775 = vpop.f32.mrb[0].mxu0
    %v2776 = vadd.f32 0.0, %v2775
    %v2777 = vpop.f32.mrb[0].mxu0
    %2778 = vmatprep.mubr.bf16.mxu0 0
    %2779 = vmatmul.mubr.bf16.gmra.mrb[0].mxu0 %v2698
    %v2780 = vpop.f32.mrb[0].mxu0
    %v2781 = vadd.f32 0.0, %v2780
    %v2782 = vpop.f32.mrb[0].mxu0
    %v2783 = vpop.f32.mrb[0].mxu0
    %v2784 = vadd.f32 0.0, %v2783
    %v2785 = vpop.f32.mrb[0].mxu0
    %2786 = vmatprep.mubr.bf16.mxu0 0
    %2787 = vmatmul.mubr.bf16.gmra.mrb[0].mxu0 %v2701
    %v2788 = vpop.f32.mrb[0].mxu0
    %v2789 = vadd.f32 0.0, %v2788
    %v2790 = vpop.f32.mrb[0].mxu0
    %v2791 = vpop.f32.mrb[0].mxu0
    %v2792 = vadd.f32 0.0, %v2791
    %v2793 = vpop.f32.mrb[0].mxu0
    %2794 = vmatprep.mubr.bf16.mxu0 0
    %2795 = vmatmul.mubr.bf16.gmra.mrb[0].mxu0 %v2704
    %v2796 = vpop.f32.mrb[0].mxu0
    %v2797 = vadd.f32 0.0, %v2796
    %v2798 = vpop.f32.mrb[0].mxu0
    %v2799 = vpop.f32.mrb[0].mxu0
    %v2800 = vadd.f32 0.0, %v2799
    %v2801 = vpop.f32.mrb[0].mxu0
    %2802 = vdwg.mxu0
    %v2803 = vmul.f32 %v2741, %v173
    %v2804 = vmul.f32 %v2744, %v176
    %v2805 = vmul.f32 %v2749, %v181
    %v2806 = vmul.f32 %v2752, %v184
    %v2807 = vmul.f32 %v2757, %v189
    %v2808 = vmul.f32 %v2760, %v192
    %v2809 = vmul.f32 %v2765, %v197
    %v2810 = vmul.f32 %v2768, %v200
    %v2811 = vmul.f32 %v2773, %v205
    %v2812 = vmul.f32 %v2776, %v208
    %v2813 = vmul.f32 %v2781, %v213
    %v2814 = vmul.f32 %v2784, %v216
    %v2815 = vmul.f32 %v2789, %v221
    %v2816 = vmul.f32 %v2792, %v224
    %v2817 = vmul.f32 %v2797, %v229
    %v2818 = vmul.f32 %v2800, %v232
    %v2819 = vrot.slane %v2803, 4
    %v2820 = vadd.f32 %v2803, %v2819
    %v2821 = vrot.slane %v2820, 2
    %v2822 = vadd.f32 %v2820, %v2821
    %v2823 = vrot.slane %v2822, 1
    %v2824 = vadd.f32 %v2822, %v2823
    %v2825 = vrot.slane %v2804, 4
    %v2826 = vadd.f32 %v2804, %v2825
    %v2827 = vrot.slane %v2826, 2
    %v2828 = vadd.f32 %v2826, %v2827
    %v2829 = vrot.slane %v2828, 1
    %v2830 = vadd.f32 %v2828, %v2829
    %v2831 = vrot.slane %v2805, 4
    %v2832 = vadd.f32 %v2805, %v2831
    %v2833 = vrot.slane %v2832, 2
    %v2834 = vadd.f32 %v2832, %v2833
    %v2835 = vrot.slane %v2834, 1
    %v2836 = vadd.f32 %v2834, %v2835
    %v2837 = vrot.slane %v2806, 4
    %v2838 = vadd.f32 %v2806, %v2837
    %v2839 = vrot.slane %v2838, 2
    %v2840 = vadd.f32 %v2838, %v2839
    %v2841 = vrot.slane %v2840, 1
    %v2842 = vadd.f32 %v2840, %v2841
    %v2843 = vrot.slane %v2807, 4
    %v2844 = vadd.f32 %v2807, %v2843
    %v2845 = vrot.slane %v2844, 2
    %v2846 = vadd.f32 %v2844, %v2845
    %v2847 = vrot.slane %v2846, 1
    %v2848 = vadd.f32 %v2846, %v2847
    %v2849 = vrot.slane %v2808, 4
    %v2850 = vadd.f32 %v2808, %v2849
    %v2851 = vrot.slane %v2850, 2
    %v2852 = vadd.f32 %v2850, %v2851
    %v2853 = vrot.slane %v2852, 1
    %v2854 = vadd.f32 %v2852, %v2853
    %v2855 = vrot.slane %v2809, 4
    %v2856 = vadd.f32 %v2809, %v2855
    %v2857 = vrot.slane %v2856, 2
    %v2858 = vadd.f32 %v2856, %v2857
    %v2859 = vrot.slane %v2858, 1
    %v2860 = vadd.f32 %v2858, %v2859
    %v2861 = vrot.slane %v2810, 4
    %v2862 = vadd.f32 %v2810, %v2861
    %v2863 = vrot.slane %v2862, 2
    %v2864 = vadd.f32 %v2862, %v2863
    %v2865 = vrot.slane %v2864, 1
    %v2866 = vadd.f32 %v2864, %v2865
    %v2867 = vrot.slane %v2811, 4
    %v2868 = vadd.f32 %v2811, %v2867
    %v2869 = vrot.slane %v2868, 2
    %v2870 = vadd.f32 %v2868, %v2869
    %v2871 = vrot.slane %v2870, 1
    %v2872 = vadd.f32 %v2870, %v2871
    %v2873 = vrot.slane %v2812, 4
    %v2874 = vadd.f32 %v2812, %v2873
    %v2875 = vrot.slane %v2874, 2
    %v2876 = vadd.f32 %v2874, %v2875
    %v2877 = vrot.slane %v2876, 1
    %v2878 = vadd.f32 %v2876, %v2877
    %v2879 = vrot.slane %v2813, 4
    %v2880 = vadd.f32 %v2813, %v2879
    %v2881 = vrot.slane %v2880, 2
    %v2882 = vadd.f32 %v2880, %v2881
    %v2883 = vrot.slane %v2882, 1
    %v2884 = vadd.f32 %v2882, %v2883
    %v2885 = vrot.slane %v2814, 4
    %v2886 = vadd.f32 %v2814, %v2885
    %v2887 = vrot.slane %v2886, 2
    %v2888 = vadd.f32 %v2886, %v2887
    %v2889 = vrot.slane %v2888, 1
    %v2890 = vadd.f32 %v2888, %v2889
    %v2891 = vrot.slane %v2815, 4
    %v2892 = vadd.f32 %v2815, %v2891
    %v2893 = vrot.slane %v2892, 2
    %v2894 = vadd.f32 %v2892, %v2893
    %v2895 = vrot.slane %v2894, 1
    %v2896 = vadd.f32 %v2894, %v2895
    %v2897 = vrot.slane %v2816, 4
    %v2898 = vadd.f32 %v2816, %v2897
    %v2899 = vrot.slane %v2898, 2
    %v2900 = vadd.f32 %v2898, %v2899
    %v2901 = vrot.slane %v2900, 1
    %v2902 = vadd.f32 %v2900, %v2901
    %v2903 = vrot.slane %v2817, 4
    %v2904 = vadd.f32 %v2817, %v2903
    %v2905 = vrot.slane %v2904, 2
    %v2906 = vadd.f32 %v2904, %v2905
    %v2907 = vrot.slane %v2906, 1
    %v2908 = vadd.f32 %v2906, %v2907
    %v2909 = vrot.slane %v2818, 4
    %v2910 = vadd.f32 %v2818, %v2909
    %v2911 = vrot.slane %v2910, 2
    %v2912 = vadd.f32 %v2910, %v2911
    %v2913 = vrot.slane %v2912, 1
    %v2914 = vadd.f32 %v2912, %v2913
    %v2915 = vmul.f32 %v2824, %v2824
    %v2916 = vmul.f32 %v2830, %v2830
    %v2917 = vmul.f32 %v2836, %v2836
    %v2918 = vmul.f32 %v2842, %v2842
    %v2919 = vmul.f32 %v2848, %v2848
    %v2920 = vmul.f32 %v2854, %v2854
    %v2921 = vmul.f32 %v2860, %v2860
    %v2922 = vmul.f32 %v2866, %v2866
    %v2923 = vmul.f32 %v2872, %v2872
    %v2924 = vmul.f32 %v2878, %v2878
    %v2925 = vmul.f32 %v2884, %v2884
    %v2926 = vmul.f32 %v2890, %v2890
    %v2927 = vmul.f32 %v2896, %v2896
    %v2928 = vmul.f32 %v2902, %v2902
    %v2929 = vmul.f32 %v2908, %v2908
    %v2930 = vmul.f32 %v2914, %v2914
    %v2931 = vpack.c.bf16 %v2915, %v2915
    %v2932 = vpack.c.bf16 %v2916, %v2916
    %v2933 = vpack.c.bf16 %v2917, %v2917
    %v2934 = vpack.c.bf16 %v2918, %v2918
    %v2935 = vpack.c.bf16 %v2919, %v2919
    %v2936 = vpack.c.bf16 %v2920, %v2920
    %v2937 = vpack.c.bf16 %v2921, %v2921
    %v2938 = vpack.c.bf16 %v2922, %v2922
    %v2939 = vpack.c.bf16 %v2923, %v2923
    %v2940 = vpack.c.bf16 %v2924, %v2924
    %v2941 = vpack.c.bf16 %v2925, %v2925
    %v2942 = vpack.c.bf16 %v2926, %v2926
    %v2943 = vpack.c.bf16 %v2927, %v2927
    %v2944 = vpack.c.bf16 %v2928, %v2928
    %v2945 = vpack.c.bf16 %v2929, %v2929
    %v2946 = vpack.c.bf16 %v2930, %v2930
    %v2963 = vunpack.c.l.b16 %v2931
    %v2964 = vunpack.c.l.b16 %v2932
    %v2965 = vunpack.c.l.b16 %v2933
    %v2966 = vunpack.c.l.b16 %v2934
    %v2967 = vunpack.c.l.b16 %v2935
    %v2968 = vunpack.c.l.b16 %v2936
    %v2969 = vunpack.c.l.b16 %v2937
    %v2970 = vunpack.c.l.b16 %v2938
    %v2971 = vunpack.c.l.b16 %v2939
    %v2972 = vunpack.c.l.b16 %v2940
    %v2973 = vunpack.c.l.b16 %v2941
    %v2974 = vunpack.c.l.b16 %v2942
    %v2975 = vunpack.c.l.b16 %v2943
    %v2976 = vunpack.c.l.b16 %v2944
    %v2977 = vunpack.c.l.b16 %v2945
    %v2978 = vunpack.c.l.b16 %v2946
    %v2979 = vsel %vm557, %v2964, %v2963
    %v2980 = vsel %vm559, %v2965, %v2979
    %v2981 = vsel %vm561, %v2966, %v2980
    %v2982 = vsel %vm563, %v2967, %v2981
    %v2983 = vsel %vm565, %v2968, %v2982
    %v2984 = vsel %vm567, %v2969, %v2983
    %v2985 = vsel %vm569, %v2970, %v2984
    %v2986 = vsel %vm557, %v2972, %v2971
    %v2987 = vsel %vm559, %v2973, %v2986
    %v2988 = vsel %vm561, %v2974, %v2987
    %v2989 = vsel %vm563, %v2975, %v2988
    %v2990 = vsel %vm565, %v2976, %v2989
    %v2991 = vsel %vm567, %v2977, %v2990
    %v2992 = vsel %vm569, %v2978, %v2991
    %v2993 = vpack.c.b16 %v2992, %v2985
    %2995 = vmatprep.subr.bf16.mxu0 0
    %2996 = vmatpush1.bf16.msra.mxu0 %v612
    %2997 = vmatprep.subr.bf16.mxu0 0
    %2998 = vmatpush1.bf16.msra.mxu0 %v613
    %2999 = vmatprep.subr.bf16.mxu0 0
    %3000 = vmatpush1.bf16.msra.mxu0 %v614
    %3001 = vmatprep.subr.bf16.mxu0 0
    %3002 = vmatpush1.bf16.msra.mxu0 %v615
    %3003 = vmatprep.subr.bf16.mxu0 0
    %3004 = vmatpush1.bf16.msra.mxu0 %v616
    %3005 = vmatprep.subr.bf16.mxu0 0
    %3006 = vmatpush1.bf16.msra.mxu0 %v617
    %3007 = vmatprep.subr.bf16.mxu0 0
    %3008 = vmatpush1.bf16.msra.mxu0 %v618
    %3009 = vmatprep.subr.bf16.mxu0 0
    %3010 = vmatpush1.bf16.msra.mxu0 %v619
    %3011 = vmatprep.subr.bf16.mxu0 0
    %3012 = vmatpush1.bf16.msra.mxu0 0
    %3013 = vmatprep.subr.bf16.mxu0 0
    %3014 = vmatpush1.bf16.msra.mxu0 0
    %3015 = vmatprep.subr.bf16.mxu0 0
    %3016 = vmatpush1.bf16.msra.mxu0 0
    %3017 = vmatprep.subr.bf16.mxu0 0
    %3018 = vmatpush1.bf16.msra.mxu0 0
    %3019 = vmatprep.subr.bf16.mxu0 0
    %3020 = vmatpush1.bf16.msra.mxu0 0
    %3021 = vmatprep.subr.bf16.mxu0 0
    %3022 = vmatpush1.bf16.msra.mxu0 0
    %3023 = vmatprep.subr.bf16.mxu0 0
    %3024 = vmatpush1.bf16.msra.mxu0 0
    %3025 = vmatprep.subr.bf16.mxu0 0
    %3026 = vmatpush1.bf16.msra.mxu0 0
    %3027 = vmatprep.mubr.bf16.mxu0 0
    %3028 = vmatmul.mubr.bf16.gmra.mrb[0].mxu0 %v2993
    %v3029 = vpop.f32.mrb[0].mxu0
    %v3030 = vadd.f32 1e-07, %v3029
    %v3031 = vpop.f32.mrb[0].mxu0
    %v3032 = vpop.f32.mrb[0].mxu0
    %v3033 = vadd.f32 1e-07, %v3032
    %v3034 = vpop.f32.mrb[0].mxu0
    %3035 = vdwg.mxu0
    %v3036 = vrsqrt.pop %v3030
    %v3037 = vrsqrt.pop %v3033
    %v3040 = vrot.slane %v3036, 1
    %v3041 = vrot.slane %v3036, 2
    %v3042 = vrot.slane %v3036, 3
    %v3043 = vrot.slane %v3036, 4
    %v3044 = vrot.slane %v3036, 5
    %v3045 = vrot.slane %v3036, 6
    %v3046 = vrot.slane %v3036, 7
    %v3047 = vrot.slane %v3037, 1
    %v3048 = vrot.slane %v3037, 2
    %v3049 = vrot.slane %v3037, 3
    %v3050 = vrot.slane %v3037, 4
    %v3051 = vrot.slane %v3037, 5
    %v3052 = vrot.slane %v3037, 6
    %v3053 = vrot.slane %v3037, 7
    %v3070 = vmul.f32 %v2824, %v3036
    %v3071 = vmul.f32 %v2830, %v3040
    %v3072 = vmul.f32 %v2836, %v3041
    %v3073 = vmul.f32 %v2842, %v3042
    %v3074 = vmul.f32 %v2848, %v3043
    %v3075 = vmul.f32 %v2854, %v3044
    %v3076 = vmul.f32 %v2860, %v3045
    %v3077 = vmul.f32 %v2866, %v3046
    %v3078 = vmul.f32 %v2872, %v3037
    %v3079 = vmul.f32 %v2878, %v3047
    %v3080 = vmul.f32 %v2884, %v3048
    %v3081 = vmul.f32 %v2890, %v3049
    %v3082 = vmul.f32 %v2896, %v3050
    %v3083 = vmul.f32 %v2902, %v3051
    %v3084 = vmul.f32 %v2908, %v3052
    %v3085 = vmul.f32 %v2914, %v3053
    %v3102 = vrot.slane %v3071, 7
    %v3103 = vsel %vm557, %v3102, %v3070
    %v3104 = vrot.slane %v3072, 6
    %v3105 = vsel %vm559, %v3104, %v3103
    %v3106 = vrot.slane %v3073, 5
    %v3107 = vsel %vm561, %v3106, %v3105
    %v3108 = vrot.slane %v3074, 4
    %v3109 = vsel %vm563, %v3108, %v3107
    %v3110 = vrot.slane %v3075, 3
    %v3111 = vsel %vm565, %v3110, %v3109
    %v3112 = vrot.slane %v3076, 2
    %v3113 = vsel %vm567, %v3112, %v3111
    %v3114 = vrot.slane %v3077, 1
    %v3115 = vsel %vm569, %v3114, %v3113
    %v3116 = vrot.slane %v3079, 7
    %v3117 = vsel %vm557, %v3116, %v3078
    %v3118 = vrot.slane %v3080, 6
    %v3119 = vsel %vm559, %v3118, %v3117
    %v3120 = vrot.slane %v3081, 5
    %v3121 = vsel %vm561, %v3120, %v3119
    %v3122 = vrot.slane %v3082, 4
    %v3123 = vsel %vm563, %v3122, %v3121
    %v3124 = vrot.slane %v3083, 3
    %v3125 = vsel %vm565, %v3124, %v3123
    %v3126 = vrot.slane %v3084, 2
    %v3127 = vsel %vm567, %v3126, %v3125
    %v3128 = vrot.slane %v3085, 1
    %v3129 = vsel %vm569, %v3128, %v3127
    %3132 = vst [vmem:[#allocation7] sm:$0xff] %v3115
    %3133 = vst [vmem:[#allocation7 + $0x8] sm:$0xff] %v3129
    // Predicated region
    $region30: #{tpu_custom_call.1} parent=1 // pred_check
      _
    $region31: #{tpu_custom_call.1} parent=1 // pred_check_branch
      %3135 = sbr.rel (0) target = $region33
    $region32: #{tpu_custom_call.1} parent=1 // pred_region
      %s3137 = ssub.s32 256, 256
      %3138 = vsyncadd [#allocation4], %s3137
      %s3139 = sshll.u32 [#allocation7], 4
      %s3140 = int_to_ptr.vmem [resolvable:$true] %s3139
      %3145 = dma.vmem_to_hbm [thread:$0]  %s3140, 256, %s5, [#allocation4], 128, 128, 8
    $region33: #{tpu_custom_call.1} parent=1 // pred_fallthru
      _
    // Predicated region
    $region34: #{tpu_custom_call.1} parent=1 // pred_check
      _
    $region35: #{tpu_custom_call.1} parent=1 // pred_check_branch
      %3147 = sbr.rel (0) target = $region37
    $region36: #{tpu_custom_call.1} parent=1 // pred_region
      %3148 = dma.done [#allocation4], 256
    $region37: #{tpu_custom_call.1} parent=1 // pred_fallthru
      _
    %3149 = vsyncpa [#allocation3], 1
    %3150 = vsyncpa [#allocation6], 1
    %3151 = vsyncpa [#allocation4], 1

</llo_original>
